<compile_context>
chip_gen: v5e
topology: v5e:2x2
jax: 0.10.0
libtpu: 0.0.40
codegen_flags: <defaults>
</compile_context>

<pallas_src>
import functools

import jax
import jax.numpy as jnp
from jax import lax
from jax.experimental import pallas as pl
from jax.experimental.pallas import tpu as pltpu

HIDDEN = 1000  # fixed by the PyTorch module


def _round_up(x, m):
    return ((x + m - 1) // m) * m


# ----------------------------------------------------------------------------
# Kernel
# ----------------------------------------------------------------------------
def deeponet_kernel(branch_ref, trunk_ref,
                    wb_ref,
                    w1_ref, b1_ref, w2_ref, b2_ref, w3_ref, b3_ref, w4_ref, b4_ref,
                    w5_ref, b5_ref,
                    out_ref):
    f32 = jnp.float32
    cdt = wb_ref.dtype  # matmul operand dtype (bf16 by default, f32 accumulate)

    # Weights are stored PyTorch-style (out, in).  Contract them against the
    # activations on the shared `in` axis so activations become feature-major
    # (out_features, rows): batch lives on the lane axis from here on.
    dn_bm = (((1,), (1,)), ((), ()))   # w:(O,I) x x:(rows,I) -> (O, rows)
    dn_fm = (((1,), (0,)), ((), ()))   # w:(O,I) x h:(I,rows) -> (O, rows)

    x_b = branch_ref[...].astype(cdt)             # (TM, branch_features)
    x_t = trunk_ref[...].astype(cdt)              # (TM, trunk_features)

    # ---- branch net: single Linear, no bias -> (Hp, TM) ----
    branch_out = lax.dot_general(
        wb_ref[...], x_b, dn_bm, preferred_element_type=f32)

    # ---- trunk net: 4x (Linear + tanh) then Linear (lastw pre-folded) ----
    h = jnp.tanh(lax.dot_general(
        w1_ref[...], x_t, dn_bm, preferred_element_type=f32) + b1_ref[...])
    h = jnp.tanh(lax.dot_general(
        w2_ref[...], h.astype(cdt), dn_fm, preferred_element_type=f32) + b2_ref[...])
    h = jnp.tanh(lax.dot_general(
        w3_ref[...], h.astype(cdt), dn_fm, preferred_element_type=f32) + b3_ref[...])
    h = jnp.tanh(lax.dot_general(
        w4_ref[...], h.astype(cdt), dn_fm, preferred_element_type=f32) + b4_ref[...])
    trunk_out = lax.dot_general(
        w5_ref[...], h.astype(cdt), dn_fm, preferred_element_type=f32) + b5_ref[...]

    # ---- combine: per-example dot product over the padded hidden axis ----
    # branch_out/trunk_out: (Hp, TM); reduce over sublanes -> lane-dense (1, TM).
    out_ref[...] = jnp.sum(branch_out * trunk_out, axis=0, keepdims=True)


# ----------------------------------------------------------------------------
# Wrapper
# ----------------------------------------------------------------------------
def deeponet_forward(branch_input, trunk_input, prepared_params, *,
                     tile_m=1024, vmem_limit_bytes=48 * 1024 * 1024):
    """Run the Pallas DeepONet forward pass. Returns (B, 1) float32."""
    (wb, w1, b1, w2, b2, w3, b3, w4, b4, w5, b5) = prepared_params
    B, bf = branch_input.shape
    _, tf = trunk_input.shape
    hp = wb.shape[0]
    cf = w1.shape[0]

    assert tile_m % 128 == 0, "tile_m must be a multiple of 128"
    TM = min(tile_m, _round_up(B, 128))
    Bp = _round_up(B, TM)
    if Bp != B:
        branch_input = jnp.pad(branch_input, ((0, Bp - B), (0, 0)))
        trunk_input = jnp.pad(trunk_input, ((0, Bp - B), (0, 0)))
    grid = (Bp // TM,)

    def act_spec(feat):
        return pl.BlockSpec((TM, feat), lambda i: (i, 0))

    def resident_spec(arr):
        # Full-shape block, constant index_map -> stays VMEM-resident.
        return pl.BlockSpec(arr.shape, lambda i: (0,) * arr.ndim)

    in_specs = [act_spec(bf), act_spec(tf),
                resident_spec(wb),
                resident_spec(w1), resident_spec(b1),
                resident_spec(w2), resident_spec(b2),
                resident_spec(w3), resident_spec(b3),
                resident_spec(w4), resident_spec(b4),
                resident_spec(w5), resident_spec(b5)]
    out_specs = pl.BlockSpec((1, TM), lambda i: (0, i))

    flops = 2 * Bp * (hp * bf + cf * tf + 3 * cf * cf + cf * hp) + 2 * Bp * hp
    weight_bytes = sum(int(a.size) * a.dtype.itemsize for a in prepared_params)
    bytes_accessed = (int(branch_input.size) * branch_input.dtype.itemsize
                      + int(trunk_input.size) * trunk_input.dtype.itemsize
                      + Bp * 4 + weight_bytes)

    out = pl.pallas_call(
        deeponet_kernel,
        out_shape=jax.ShapeDtypeStruct((1, Bp), jnp.float32),
        grid=grid,
        in_specs=in_specs,
        out_specs=out_specs,
        compiler_params=pltpu.CompilerParams(
            dimension_semantics=("parallel",),
            vmem_limit_bytes=vmem_limit_bytes),
        cost_estimate=pl.CostEstimate(
            flops=int(flops),
            transcendentals=int(4 * Bp * cf),
            bytes_accessed=int(bytes_accessed)),
    )(branch_input, trunk_input,
      wb, w1, b1, w2, b2, w3, b3, w4, b4, w5, b5)

    return out[0, :B].reshape(B, 1)


# ----------------------------------------------------------------------------
# Parameter handling
# ----------------------------------------------------------------------------
def init_params(key, branch_features, trunk_features, common_features,
                hidden=HIDDEN):
    """Deterministic synthetic parameters in PyTorch (out, in) layout."""
    ks = jax.random.split(key, 12)
    f32 = jnp.float32

    def linear_w(k, fan_in, fan_out):
        bound = 1.0 / float(fan_in) ** 0.5
        return jax.random.uniform(k, (fan_out, fan_in), f32, -bound, bound)

    def linear_b(k, fan_in, fan_out):
        bound = 1.0 / float(fan_in) ** 0.5
        return jax.random.uniform(k, (fan_out,), f32, -bound, bound)

    wb = linear_w(ks[0], branch_features, hidden)                  # no bias
    w1 = linear_w(ks[1], trunk_features, common_features)
    b1 = linear_b(ks[2], trunk_features, common_features)
    w2 = linear_w(ks[3], common_features, common_features)
    b2 = linear_b(ks[4], common_features, common_features)
    w3 = linear_w(ks[5], common_features, common_features)
    b3 = linear_b(ks[6], common_features, common_features)
    w4 = linear_w(ks[7], common_features, common_features)
    b4 = linear_b(ks[8], common_features, common_features)
    w5 = linear_w(ks[9], common_features, hidden)
    b5 = linear_b(ks[10], common_features, hidden)
    lastw = jax.random.normal(ks[11], (hidden,), f32)              # torch.randn(1000)
    return (wb, w1, b1, w2, b2, w3, b3, w4, b4, w5, b5, lastw)


def prepare_params(raw_params, compute_dtype=jnp.bfloat16):
    """One-time preprocessing: fold last_layer_weights into W5/b5, pad HIDDEN
    to a multiple of 128, cast matmul weights to compute_dtype (biases f32)."""
    (wb, w1, b1, w2, b2, w3, b3, w4, b4, w5, b5, lastw) = raw_params
    f32 = jnp.float32
    H = wb.shape[0]
    hp = _round_up(H, 128)
    pad = hp - H

    # Fold lastw (in f32, before any cast) so padded columns are exactly zero.
    w5_f = w5 * lastw[:, None]
    b5_f = b5 * lastw

    wb_p = jnp.pad(wb, ((0, pad), (0, 0))).astype(compute_dtype)
    w5_p = jnp.pad(w5_f, ((0, pad), (0, 0))).astype(compute_dtype)
    b5_p = jnp.pad(b5_f, (0, pad)).astype(f32)[:, None]            # (Hp, 1)

    def hidden_layer(w, b):
        return w.astype(compute_dtype), b.astype(f32)[:, None]     # (cf, 1)

    w1p, b1p = hidden_layer(w1, b1)
    w2p, b2p = hidden_layer(w2, b2)
    w3p, b3p = hidden_layer(w3, b3)
    w4p, b4p = hidden_layer(w4, b4)
    return (wb_p, w1p, b1p, w2p, b2p, w3p, b3p, w4p, b4p, w5_p, b5_p)


# ----------------------------------------------------------------------------
# References
# ----------------------------------------------------------------------------
def reference_forward_original(branch_input, trunk_input, raw_params):
    """Pure f32 JAX reference, exact PyTorch-module semantics."""
    (wb, w1, b1, w2, b2, w3, b3, w4, b4, w5, b5, lastw) = raw_params
    branch_out = branch_input @ wb.T
    h = jnp.tanh(trunk_input @ w1.T + b1)
    h = jnp.tanh(h @ w2.T + b2)
    h = jnp.tanh(h @ w3.T + b3)
    h = jnp.tanh(h @ w4.T + b4)
    trunk_out = h @ w5.T + b5
    return jnp.sum(branch_out * trunk_out * lastw, axis=1, keepdims=True)


def reference_forward_prepared(branch_input, trunk_input, prepared_params):
    """JAX reference applying the same mixed-precision casts as the kernel."""
    (wb, w1, b1, w2, b2, w3, b3, w4, b4, w5, b5) = prepared_params
    f32 = jnp.float32
    cdt = wb.dtype

    def lin(x, w, b=None):
        y = lax.dot_general(x.astype(cdt), w, (((1,), (1,)), ((), ())),
                            preferred_element_type=f32)
        return y if b is None else y + b[:, 0]

    branch_out = lin(branch_input, wb)
    h = jnp.tanh(lin(trunk_input, w1, b1))
    h = jnp.tanh(lin(h, w2, b2))
    h = jnp.tanh(lin(h, w3, b3))
    h = jnp.tanh(lin(h, w4, b4))
    trunk_out = lin(h, w5, b5)
    return jnp.sum(branch_out * trunk_out, axis=1, keepdims=True)


# ----------------------------------------------------------------------------
# Demo / correctness check
# ----------------------------------------------------------------------------
if __name__ == "__main__":
    batch = 8
    branch_features = 32
    trunk_features = 8
    common_features = 32

    key = jax.random.PRNGKey(0)
    k_params, k_branch, k_trunk = jax.random.split(key, 3)

    raw = init_params(k_params, branch_features, trunk_features, common_features)
    branch_input = jax.random.normal(k_branch, (batch, branch_features), jnp.float32)
    trunk_input = jax.random.normal(k_trunk, (batch, trunk_features), jnp.float32)

    # 1) Full f32 path: exact original-module semantics.
    prep_f32 = prepare_params(raw, compute_dtype=jnp.float32)
    out_f32 = jax.block_until_ready(
        deeponet_forward(branch_input, trunk_input, prep_f32))
    ref_orig = reference_forward_original(branch_input, trunk_input, raw)
    assert out_f32.shape == (batch, 1), out_f32.shape
    assert jnp.allclose(out_f32, ref_orig, atol=1e-3, rtol=1e-3), (out_f32, ref_orig)

    # 2) Mixed-precision path (bf16 MXU operands, f32 accumulate) vs a JAX
    #    reference applying identical casts.
    prep_bf16 = prepare_params(raw, compute_dtype=jnp.bfloat16)
    out_bf16 = jax.block_until_ready(
        deeponet_forward(branch_input, trunk_input, prep_bf16))
    ref_bf16 = reference_forward_prepared(branch_input, trunk_input, prep_bf16)
    assert out_bf16.shape == (batch, 1), out_bf16.shape
    assert jnp.allclose(out_bf16, ref_bf16, atol=5e-3, rtol=5e-3), (out_bf16, ref_bf16)

    print("KERNEL_OK")
</pallas_src>

<mosaic_0001>
module attributes {stable_mosaic.version = 11 : i64} {
  func.func @deeponet_kernel(%arg0: i32, %arg1: memref<128x32xf32, #tpu.memory_space<vmem>>, %arg2: memref<128x8xf32, #tpu.memory_space<vmem>>, %arg3: memref<1024x32xf32, #tpu.memory_space<vmem>>, %arg4: memref<32x8xf32, #tpu.memory_space<vmem>>, %arg5: memref<32x1xf32, #tpu.memory_space<vmem>>, %arg6: memref<32x32xf32, #tpu.memory_space<vmem>>, %arg7: memref<32x1xf32, #tpu.memory_space<vmem>>, %arg8: memref<32x32xf32, #tpu.memory_space<vmem>>, %arg9: memref<32x1xf32, #tpu.memory_space<vmem>>, %arg10: memref<32x32xf32, #tpu.memory_space<vmem>>, %arg11: memref<32x1xf32, #tpu.memory_space<vmem>>, %arg12: memref<1024x32xf32, #tpu.memory_space<vmem>>, %arg13: memref<1024x1xf32, #tpu.memory_space<vmem>>, %arg14: memref<1x128xf32, #tpu.memory_space<vmem>>) attributes {dimension_semantics = [#tpu.dimension_semantics<parallel>], iteration_bounds = array<i64: 1>, scalar_prefetch = 0 : i64, scratch_operands = 0 : i64, tpu.core_type = #tpu.core_type<tc>, window_params = [{transform_indices = @transform_0, window_bounds = array<i64: 128, 32>}, {transform_indices = @transform_1, window_bounds = array<i64: 128, 8>}, {pipeline_mode = #tpu.pipeline_mode<synchronous>, transform_indices = @transform_2, window_bounds = array<i64: 1024, 32>}, {pipeline_mode = #tpu.pipeline_mode<synchronous>, transform_indices = @transform_3, window_bounds = array<i64: 32, 8>}, {pipeline_mode = #tpu.pipeline_mode<synchronous>, transform_indices = @transform_4, window_bounds = array<i64: 32, 1>}, {pipeline_mode = #tpu.pipeline_mode<synchronous>, transform_indices = @transform_5, window_bounds = array<i64: 32, 32>}, {pipeline_mode = #tpu.pipeline_mode<synchronous>, transform_indices = @transform_6, window_bounds = array<i64: 32, 1>}, {pipeline_mode = #tpu.pipeline_mode<synchronous>, transform_indices = @transform_7, window_bounds = array<i64: 32, 32>}, {pipeline_mode = #tpu.pipeline_mode<synchronous>, transform_indices = @transform_8, window_bounds = array<i64: 32, 1>}, {pipeline_mode = #tpu.pipeline_mode<synchronous>, transform_indices = @transform_9, window_bounds = array<i64: 32, 32>}, {pipeline_mode = #tpu.pipeline_mode<synchronous>, transform_indices = @transform_10, window_bounds = array<i64: 32, 1>}, {pipeline_mode = #tpu.pipeline_mode<synchronous>, transform_indices = @transform_11, window_bounds = array<i64: 1024, 32>}, {pipeline_mode = #tpu.pipeline_mode<synchronous>, transform_indices = @transform_12, window_bounds = array<i64: 1024, 1>}, {transform_indices = @transform_13, window_bounds = array<i64: 1, 128>}]} {
    %c0 = arith.constant 0 : index
    %c0_0 = arith.constant 0 : index
    %0 = vector.load %arg1[%c0, %c0_0] : memref<128x32xf32, #tpu.memory_space<vmem>>, vector<128x32xf32>
    %c0_1 = arith.constant 0 : index
    %c0_2 = arith.constant 0 : index
    %1 = vector.load %arg2[%c0_1, %c0_2] : memref<128x8xf32, #tpu.memory_space<vmem>>, vector<128x8xf32>
    %c0_3 = arith.constant 0 : index
    %c0_4 = arith.constant 0 : index
    %2 = vector.load %arg3[%c0_3, %c0_4] : memref<1024x32xf32, #tpu.memory_space<vmem>>, vector<1024x32xf32>
    %cst = arith.constant dense<0.000000e+00> : vector<1024x128xf32>
    %3 = tpu.matmul %2, %0, %cst {dimension_numbers = #tpu.dot_dimension_numbers<[1], [1], [0], [0], [0, 0, 1, 0], [], []>} : vector<1024x32xf32>, vector<128x32xf32>, vector<1024x128xf32> -> vector<1024x128xf32>
    %c0_5 = arith.constant 0 : index
    %c0_6 = arith.constant 0 : index
    %4 = vector.load %arg4[%c0_5, %c0_6] : memref<32x8xf32, #tpu.memory_space<vmem>>, vector<32x8xf32>
    %cst_7 = arith.constant dense<0.000000e+00> : vector<32x128xf32>
    %5 = tpu.matmul %4, %1, %cst_7 {dimension_numbers = #tpu.dot_dimension_numbers<[1], [1], [0], [0], [0, 0, 1, 0], [], []>} : vector<32x8xf32>, vector<128x8xf32>, vector<32x128xf32> -> vector<32x128xf32>
    %c0_8 = arith.constant 0 : index
    %c0_9 = arith.constant 0 : index
    %6 = vector.load %arg5[%c0_8, %c0_9] : memref<32x1xf32, #tpu.memory_space<vmem>>, vector<32x1xf32>
    %7 = vector.broadcast %6 : vector<32x1xf32> to vector<32x128xf32>
    %8 = arith.addf %5, %7 : vector<32x128xf32>
    %9 = math.tanh %8 : vector<32x128xf32>
    %c0_10 = arith.constant 0 : index
    %c0_11 = arith.constant 0 : index
    %10 = vector.load %arg6[%c0_10, %c0_11] : memref<32x32xf32, #tpu.memory_space<vmem>>, vector<32x32xf32>
    %cst_12 = arith.constant dense<0.000000e+00> : vector<32x128xf32>
    %11 = tpu.matmul %10, %9, %cst_12 {dimension_numbers = #tpu.dot_dimension_numbers<[1], [0], [0], [1], [0, 0, 1, 1], [], []>} : vector<32x32xf32>, vector<32x128xf32>, vector<32x128xf32> -> vector<32x128xf32>
    %c0_13 = arith.constant 0 : index
    %c0_14 = arith.constant 0 : index
    %12 = vector.load %arg7[%c0_13, %c0_14] : memref<32x1xf32, #tpu.memory_space<vmem>>, vector<32x1xf32>
    %13 = vector.broadcast %12 : vector<32x1xf32> to vector<32x128xf32>
    %14 = arith.addf %11, %13 : vector<32x128xf32>
    %15 = math.tanh %14 : vector<32x128xf32>
    %c0_15 = arith.constant 0 : index
    %c0_16 = arith.constant 0 : index
    %16 = vector.load %arg8[%c0_15, %c0_16] : memref<32x32xf32, #tpu.memory_space<vmem>>, vector<32x32xf32>
    %cst_17 = arith.constant dense<0.000000e+00> : vector<32x128xf32>
    %17 = tpu.matmul %16, %15, %cst_17 {dimension_numbers = #tpu.dot_dimension_numbers<[1], [0], [0], [1], [0, 0, 1, 1], [], []>} : vector<32x32xf32>, vector<32x128xf32>, vector<32x128xf32> -> vector<32x128xf32>
    %c0_18 = arith.constant 0 : index
    %c0_19 = arith.constant 0 : index
    %18 = vector.load %arg9[%c0_18, %c0_19] : memref<32x1xf32, #tpu.memory_space<vmem>>, vector<32x1xf32>
    %19 = vector.broadcast %18 : vector<32x1xf32> to vector<32x128xf32>
    %20 = arith.addf %17, %19 : vector<32x128xf32>
    %21 = math.tanh %20 : vector<32x128xf32>
    %c0_20 = arith.constant 0 : index
    %c0_21 = arith.constant 0 : index
    %22 = vector.load %arg10[%c0_20, %c0_21] : memref<32x32xf32, #tpu.memory_space<vmem>>, vector<32x32xf32>
    %cst_22 = arith.constant dense<0.000000e+00> : vector<32x128xf32>
    %23 = tpu.matmul %22, %21, %cst_22 {dimension_numbers = #tpu.dot_dimension_numbers<[1], [0], [0], [1], [0, 0, 1, 1], [], []>} : vector<32x32xf32>, vector<32x128xf32>, vector<32x128xf32> -> vector<32x128xf32>
    %c0_23 = arith.constant 0 : index
    %c0_24 = arith.constant 0 : index
    %24 = vector.load %arg11[%c0_23, %c0_24] : memref<32x1xf32, #tpu.memory_space<vmem>>, vector<32x1xf32>
    %25 = vector.broadcast %24 : vector<32x1xf32> to vector<32x128xf32>
    %26 = arith.addf %23, %25 : vector<32x128xf32>
    %27 = math.tanh %26 : vector<32x128xf32>
    %c0_25 = arith.constant 0 : index
    %c0_26 = arith.constant 0 : index
    %28 = vector.load %arg12[%c0_25, %c0_26] : memref<1024x32xf32, #tpu.memory_space<vmem>>, vector<1024x32xf32>
    %cst_27 = arith.constant dense<0.000000e+00> : vector<1024x128xf32>
    %29 = tpu.matmul %28, %27, %cst_27 {dimension_numbers = #tpu.dot_dimension_numbers<[1], [0], [0], [1], [0, 0, 1, 1], [], []>} : vector<1024x32xf32>, vector<32x128xf32>, vector<1024x128xf32> -> vector<1024x128xf32>
    %c0_28 = arith.constant 0 : index
    %c0_29 = arith.constant 0 : index
    %30 = vector.load %arg13[%c0_28, %c0_29] : memref<1024x1xf32, #tpu.memory_space<vmem>>, vector<1024x1xf32>
    %31 = vector.broadcast %30 : vector<1024x1xf32> to vector<1024x128xf32>
    %32 = arith.addf %29, %31 : vector<1024x128xf32>
    %33 = arith.mulf %3, %32 : vector<1024x128xf32>
    %cst_30 = arith.constant dense<0.000000e+00> : vector<128xf32>
    %34 = vector.multi_reduction <add>, %33, %cst_30 [0] : vector<1024x128xf32> to vector<128xf32>
    %35 = vector.shape_cast %34 : vector<128xf32> to vector<1x128xf32>
    %c0_31 = arith.constant 0 : index
    %c0_32 = arith.constant 0 : index
    %36 = vector.load %arg14[%c0_31, %c0_32] : memref<1x128xf32, #tpu.memory_space<vmem>>, vector<1x128xf32>
    tpu.vector_store %arg14[%c0_31, %c0_32], %35 {strides = array<i32>} : memref<1x128xf32, #tpu.memory_space<vmem>>, vector<1x128xf32>,
    return
  }
  func.func @transform_0(%arg0: i32) -> (i32, i32) {
    %c0_i32 = arith.constant 0 : i32
    %c0_i32_0 = arith.constant 0 : i32
    return %arg0, %c0_i32 : i32, i32
  }
  func.func @transform_1(%arg0: i32) -> (i32, i32) {
    %c0_i32 = arith.constant 0 : i32
    %c0_i32_0 = arith.constant 0 : i32
    return %arg0, %c0_i32 : i32, i32
  }
  func.func @transform_2(%arg0: i32) -> (i32, i32) {
    %c0_i32 = arith.constant 0 : i32
    %c0_i32_0 = arith.constant 0 : i32
    %c0_i32_1 = arith.constant 0 : i32
    return %c0_i32, %c0_i32_0 : i32, i32
  }
  func.func @transform_3(%arg0: i32) -> (i32, i32) {
    %c0_i32 = arith.constant 0 : i32
    %c0_i32_0 = arith.constant 0 : i32
    %c0_i32_1 = arith.constant 0 : i32
    return %c0_i32, %c0_i32_0 : i32, i32
  }
  func.func @transform_4(%arg0: i32) -> (i32, i32) {
    %c0_i32 = arith.constant 0 : i32
    %c0_i32_0 = arith.constant 0 : i32
    %c0_i32_1 = arith.constant 0 : i32
    return %c0_i32, %c0_i32_0 : i32, i32
  }
  func.func @transform_5(%arg0: i32) -> (i32, i32) {
    %c0_i32 = arith.constant 0 : i32
    %c0_i32_0 = arith.constant 0 : i32
    %c0_i32_1 = arith.constant 0 : i32
    return %c0_i32, %c0_i32_0 : i32, i32
  }
  func.func @transform_6(%arg0: i32) -> (i32, i32) {
    %c0_i32 = arith.constant 0 : i32
    %c0_i32_0 = arith.constant 0 : i32
    %c0_i32_1 = arith.constant 0 : i32
    return %c0_i32, %c0_i32_0 : i32, i32
  }
  func.func @transform_7(%arg0: i32) -> (i32, i32) {
    %c0_i32 = arith.constant 0 : i32
    %c0_i32_0 = arith.constant 0 : i32
    %c0_i32_1 = arith.constant 0 : i32
    return %c0_i32, %c0_i32_0 : i32, i32
  }
  func.func @transform_8(%arg0: i32) -> (i32, i32) {
    %c0_i32 = arith.constant 0 : i32
    %c0_i32_0 = arith.constant 0 : i32
    %c0_i32_1 = arith.constant 0 : i32
    return %c0_i32, %c0_i32_0 : i32, i32
  }
  func.func @transform_9(%arg0: i32) -> (i32, i32) {
    %c0_i32 = arith.constant 0 : i32
    %c0_i32_0 = arith.constant 0 : i32
    %c0_i32_1 = arith.constant 0 : i32
    return %c0_i32, %c0_i32_0 : i32, i32
  }
  func.func @transform_10(%arg0: i32) -> (i32, i32) {
    %c0_i32 = arith.constant 0 : i32
    %c0_i32_0 = arith.constant 0 : i32
    %c0_i32_1 = arith.constant 0 : i32
    return %c0_i32, %c0_i32_0 : i32, i32
  }
  func.func @transform_11(%arg0: i32) -> (i32, i32) {
    %c0_i32 = arith.constant 0 : i32
    %c0_i32_0 = arith.constant 0 : i32
    %c0_i32_1 = arith.constant 0 : i32
    return %c0_i32, %c0_i32_0 : i32, i32
  }
  func.func @transform_12(%arg0: i32) -> (i32, i32) {
    %c0_i32 = arith.constant 0 : i32
    %c0_i32_0 = arith.constant 0 : i32
    %c0_i32_1 = arith.constant 0 : i32
    return %c0_i32, %c0_i32_0 : i32, i32
  }
  func.func @transform_13(%arg0: i32) -> (i32, i32) {
    %c0_i32 = arith.constant 0 : i32
    %c0_i32_0 = arith.constant 0 : i32
    return %c0_i32, %arg0 : i32, i32
  }
}

</mosaic_0001>

<llo_original>
// kernel: tpu_custom_call.1
$region0: #{tpu_custom_call.1}
  #allocation0 [shape = 'u32[]', space=smem, size = 0x4, offset = 0x4, fixed_abs, tag = 'smem constant byte address 0x4 - core index']
  #allocation1 [shape = 'u32[72,128]{1,0:T(1,128)}', space=vmem, size = 0x9000, scoped, tag = 'internal scratch']
  %s0 = inlined_call_operand.vmem [shape: f32[128,32], index: 0, kind: input, shape index: {}]
  %s1 = inlined_call_operand.vmem [shape: f32[128,8], index: 1, kind: input, shape index: {}]
  %s2 = inlined_call_operand.vmem [shape: f32[1024,32], index: 2, kind: input, shape index: {}]
  %s3 = inlined_call_operand.vmem [shape: f32[32,8], index: 3, kind: input, shape index: {}]
  %s4 = inlined_call_operand.vmem [shape: f32[32,1], index: 4, kind: input, shape index: {}]
  %s5 = inlined_call_operand.vmem [shape: f32[32,32], index: 5, kind: input, shape index: {}]
  %s6 = inlined_call_operand.vmem [shape: f32[32,1], index: 6, kind: input, shape index: {}]
  %s7 = inlined_call_operand.vmem [shape: f32[32,32], index: 7, kind: input, shape index: {}]
  %s8 = inlined_call_operand.vmem [shape: f32[32,1], index: 8, kind: input, shape index: {}]
  %s9 = inlined_call_operand.vmem [shape: f32[32,32], index: 9, kind: input, shape index: {}]
  %s10 = inlined_call_operand.vmem [shape: f32[32,1], index: 10, kind: input, shape index: {}]
  %s11 = inlined_call_operand.vmem [shape: f32[1024,32], index: 11, kind: input, shape index: {}]
  %s12 = inlined_call_operand.vmem [shape: f32[1024,1], index: 12, kind: input, shape index: {}]
  %s13 = inlined_call_operand.hbm [shape: f32[1,128], index: 13, kind: output, shape index: {}]
  %s14 = sld [smem:[#allocation0]]
  $region62: #{tpu_custom_call.1} parent=0
    _
  %s16 = ssub.s32 1, %s14
  %s17 = scalar_select 0, %s16, %s14
  $region1: #{tpu_custom_call.1} parent=0
    #allocation2 [shape = 'u8[512]{0}', space=vmem, size = 0x400, scoped, tag = 'output window, operand 0, single buffered']
    #allocation3 [shape = 's32[1]{0}', space=sflag, size = 0x4, scoped, tag = 'scoped memory for tpu_custom_call.1']
    %18 = vsyncpa [#allocation3], 0
    // Predicated region
    $region2: #{tpu_custom_call.1} parent=1 // pred_check
      _
    $region3: #{tpu_custom_call.1} parent=1 // pred_check_branch
      %20 = sbr.rel (0) target = $region5
    $region4: #{tpu_custom_call.1} parent=1 // pred_region
      _
    $region5: #{tpu_custom_call.1} parent=1 // pred_fallthru
      _
    // Predicated region
    $region6: #{tpu_custom_call.1} parent=1 // pred_check
      _
    $region7: #{tpu_custom_call.1} parent=1 // pred_check_branch
      %22 = sbr.rel (0) target = $region9
    $region8: #{tpu_custom_call.1} parent=1 // pred_region
      _
    $region9: #{tpu_custom_call.1} parent=1 // pred_fallthru
      _
    // Predicated region
    $region10: #{tpu_custom_call.1} parent=1 // pred_check
      _
    $region11: #{tpu_custom_call.1} parent=1 // pred_check_branch
      %24 = sbr.rel (0) target = $region13
    $region12: #{tpu_custom_call.1} parent=1 // pred_region
      _
    $region13: #{tpu_custom_call.1} parent=1 // pred_fallthru
      _
    // Predicated region
    $region14: #{tpu_custom_call.1} parent=1 // pred_check
      _
    $region15: #{tpu_custom_call.1} parent=1 // pred_check_branch
      %26 = sbr.rel (0) target = $region17
    $region16: #{tpu_custom_call.1} parent=1 // pred_region
      _
    $region17: #{tpu_custom_call.1} parent=1 // pred_fallthru
      _
    // Predicated region
    $region18: #{tpu_custom_call.1} parent=1 // pred_check
      _
    $region19: #{tpu_custom_call.1} parent=1 // pred_check_branch
      %28 = sbr.rel (0) target = $region21
    $region20: #{tpu_custom_call.1} parent=1 // pred_region
      _
    $region21: #{tpu_custom_call.1} parent=1 // pred_fallthru
      _
    // Predicated region
    $region22: #{tpu_custom_call.1} parent=1 // pred_check
      _
    $region23: #{tpu_custom_call.1} parent=1 // pred_check_branch
      %30 = sbr.rel (0) target = $region25
    $region24: #{tpu_custom_call.1} parent=1 // pred_region
      _
    $region25: #{tpu_custom_call.1} parent=1 // pred_fallthru
      _
    // Predicated region
    $region26: #{tpu_custom_call.1} parent=1 // pred_check
      _
    $region27: #{tpu_custom_call.1} parent=1 // pred_check_branch
      %32 = sbr.rel (0) target = $region29
    $region28: #{tpu_custom_call.1} parent=1 // pred_region
      _
    $region29: #{tpu_custom_call.1} parent=1 // pred_fallthru
      _
    // Predicated region
    $region30: #{tpu_custom_call.1} parent=1 // pred_check
      _
    $region31: #{tpu_custom_call.1} parent=1 // pred_check_branch
      %34 = sbr.rel (0) target = $region33
    $region32: #{tpu_custom_call.1} parent=1 // pred_region
      _
    $region33: #{tpu_custom_call.1} parent=1 // pred_fallthru
      _
    // Predicated region
    $region34: #{tpu_custom_call.1} parent=1 // pred_check
      _
    $region35: #{tpu_custom_call.1} parent=1 // pred_check_branch
      %36 = sbr.rel (0) target = $region37
    $region36: #{tpu_custom_call.1} parent=1 // pred_region
      _
    $region37: #{tpu_custom_call.1} parent=1 // pred_fallthru
      _
    // Predicated region
    $region38: #{tpu_custom_call.1} parent=1 // pred_check
      _
    $region39: #{tpu_custom_call.1} parent=1 // pred_check_branch
      %38 = sbr.rel (0) target = $region41
    $region40: #{tpu_custom_call.1} parent=1 // pred_region
      _
    $region41: #{tpu_custom_call.1} parent=1 // pred_fallthru
      _
    // Predicated region
    $region42: #{tpu_custom_call.1} parent=1 // pred_check
      _
    $region43: #{tpu_custom_call.1} parent=1 // pred_check_branch
      %40 = sbr.rel (0) target = $region45
    $region44: #{tpu_custom_call.1} parent=1 // pred_region
      _
    $region45: #{tpu_custom_call.1} parent=1 // pred_fallthru
      _
    // Predicated region
    $region46: #{tpu_custom_call.1} parent=1 // pred_check
      _
    $region47: #{tpu_custom_call.1} parent=1 // pred_check_branch
      %42 = sbr.rel (0) target = $region49
    $region48: #{tpu_custom_call.1} parent=1 // pred_region
      _
    $region49: #{tpu_custom_call.1} parent=1 // pred_fallthru
      _
    // Predicated region
    $region50: #{tpu_custom_call.1} parent=1 // pred_check
      _
    $region51: #{tpu_custom_call.1} parent=1 // pred_check_branch
      %44 = sbr.rel (0) target = $region53
    $region52: #{tpu_custom_call.1} parent=1 // pred_region
      _
    $region53: #{tpu_custom_call.1} parent=1 // pred_fallthru
      _
    %v45 = vld [vmem:[%s0] sm:$0xff]
    %v46 = vld [vmem:[%s0 + $0x8] sm:$0xff]
    %v47 = vld [vmem:[%s0 + $0x10] sm:$0xff]
    %v48 = vld [vmem:[%s0 + $0x18] sm:$0xff]
    %v49 = vld [vmem:[%s0 + $0x20] sm:$0xff]
    %v50 = vld [vmem:[%s0 + $0x28] sm:$0xff]
    %v51 = vld [vmem:[%s0 + $0x30] sm:$0xff]
    %v52 = vld [vmem:[%s0 + $0x38] sm:$0xff]
    %v53 = vld [vmem:[%s0 + $0x40] sm:$0xff]
    %v54 = vld [vmem:[%s0 + $0x48] sm:$0xff]
    %v55 = vld [vmem:[%s0 + $0x50] sm:$0xff]
    %v56 = vld [vmem:[%s0 + $0x58] sm:$0xff]
    %v57 = vld [vmem:[%s0 + $0x60] sm:$0xff]
    %v58 = vld [vmem:[%s0 + $0x68] sm:$0xff]
    %v59 = vld [vmem:[%s0 + $0x70] sm:$0xff]
    %v60 = vld [vmem:[%s0 + $0x78] sm:$0xff]
    %v61 = vld [vmem:[%s1] sm:$0xff]
    %v62 = vld [vmem:[%s1 + $0x8] sm:$0xff]
    %v63 = vld [vmem:[%s1 + $0x10] sm:$0xff]
    %v64 = vld [vmem:[%s1 + $0x18] sm:$0xff]
    %v65 = vld [vmem:[%s1 + $0x20] sm:$0xff]
    %v66 = vld [vmem:[%s1 + $0x28] sm:$0xff]
    %v67 = vld [vmem:[%s1 + $0x30] sm:$0xff]
    %v68 = vld [vmem:[%s1 + $0x38] sm:$0xff]
    %v69 = vld [vmem:[%s1 + $0x40] sm:$0xff]
    %v70 = vld [vmem:[%s1 + $0x48] sm:$0xff]
    %v71 = vld [vmem:[%s1 + $0x50] sm:$0xff]
    %v72 = vld [vmem:[%s1 + $0x58] sm:$0xff]
    %v73 = vld [vmem:[%s1 + $0x60] sm:$0xff]
    %v74 = vld [vmem:[%s1 + $0x68] sm:$0xff]
    %v75 = vld [vmem:[%s1 + $0x70] sm:$0xff]
    %v76 = vld [vmem:[%s1 + $0x78] sm:$0xff]
    %v77 = vld [vmem:[%s2] sm:$0xff]
    %v78 = vld [vmem:[%s2 + $0x8] sm:$0xff]
    %v79 = vld [vmem:[%s2 + $0x10] sm:$0xff]
    %v80 = vld [vmem:[%s2 + $0x18] sm:$0xff]
    %v81 = vld [vmem:[%s2 + $0x20] sm:$0xff]
    %v82 = vld [vmem:[%s2 + $0x28] sm:$0xff]
    %v83 = vld [vmem:[%s2 + $0x30] sm:$0xff]
    %v84 = vld [vmem:[%s2 + $0x38] sm:$0xff]
    %v85 = vld [vmem:[%s2 + $0x40] sm:$0xff]
    %v86 = vld [vmem:[%s2 + $0x48] sm:$0xff]
    %v87 = vld [vmem:[%s2 + $0x50] sm:$0xff]
    %v88 = vld [vmem:[%s2 + $0x58] sm:$0xff]
    %v89 = vld [vmem:[%s2 + $0x60] sm:$0xff]
    %v90 = vld [vmem:[%s2 + $0x68] sm:$0xff]
    %v91 = vld [vmem:[%s2 + $0x70] sm:$0xff]
    %v92 = vld [vmem:[%s2 + $0x78] sm:$0xff]
    %v93 = vld [vmem:[%s2 + $0x80] sm:$0xff]
    %v94 = vld [vmem:[%s2 + $0x88] sm:$0xff]
    %v95 = vld [vmem:[%s2 + $0x90] sm:$0xff]
    %v96 = vld [vmem:[%s2 + $0x98] sm:$0xff]
    %v97 = vld [vmem:[%s2 + $0xa0] sm:$0xff]
    %v98 = vld [vmem:[%s2 + $0xa8] sm:$0xff]
    %v99 = vld [vmem:[%s2 + $0xb0] sm:$0xff]
    %v100 = vld [vmem:[%s2 + $0xb8] sm:$0xff]
    %v101 = vld [vmem:[%s2 + $0xc0] sm:$0xff]
    %v102 = vld [vmem:[%s2 + $0xc8] sm:$0xff]
    %v103 = vld [vmem:[%s2 + $0xd0] sm:$0xff]
    %v104 = vld [vmem:[%s2 + $0xd8] sm:$0xff]
    %v105 = vld [vmem:[%s2 + $0xe0] sm:$0xff]
    %v106 = vld [vmem:[%s2 + $0xe8] sm:$0xff]
    %v107 = vld [vmem:[%s2 + $0xf0] sm:$0xff]
    %v108 = vld [vmem:[%s2 + $0xf8] sm:$0xff]
    %v109 = vld [vmem:[%s2 + $0x100] sm:$0xff]
    %v110 = vld [vmem:[%s2 + $0x108] sm:$0xff]
    %v111 = vld [vmem:[%s2 + $0x110] sm:$0xff]
    %v112 = vld [vmem:[%s2 + $0x118] sm:$0xff]
    %v113 = vld [vmem:[%s2 + $0x120] sm:$0xff]
    %v114 = vld [vmem:[%s2 + $0x128] sm:$0xff]
    %v115 = vld [vmem:[%s2 + $0x130] sm:$0xff]
    %v116 = vld [vmem:[%s2 + $0x138] sm:$0xff]
    %v117 = vld [vmem:[%s2 + $0x140] sm:$0xff]
    %v118 = vld [vmem:[%s2 + $0x148] sm:$0xff]
    %v119 = vld [vmem:[%s2 + $0x150] sm:$0xff]
    %v120 = vld [vmem:[%s2 + $0x158] sm:$0xff]
    %v121 = vld [vmem:[%s2 + $0x160] sm:$0xff]
    %v122 = vld [vmem:[%s2 + $0x168] sm:$0xff]
    %v123 = vld [vmem:[%s2 + $0x170] sm:$0xff]
    %v124 = vld [vmem:[%s2 + $0x178] sm:$0xff]
    %v125 = vld [vmem:[%s2 + $0x180] sm:$0xff]
    %v126 = vld [vmem:[%s2 + $0x188] sm:$0xff]
    %v127 = vld [vmem:[%s2 + $0x190] sm:$0xff]
    %v128 = vld [vmem:[%s2 + $0x198] sm:$0xff]
    %v129 = vld [vmem:[%s2 + $0x1a0] sm:$0xff]
    %v130 = vld [vmem:[%s2 + $0x1a8] sm:$0xff]
    %v131 = vld [vmem:[%s2 + $0x1b0] sm:$0xff]
    %v132 = vld [vmem:[%s2 + $0x1b8] sm:$0xff]
    %v133 = vld [vmem:[%s2 + $0x1c0] sm:$0xff]
    %v134 = vld [vmem:[%s2 + $0x1c8] sm:$0xff]
    %v135 = vld [vmem:[%s2 + $0x1d0] sm:$0xff]
    %v136 = vld [vmem:[%s2 + $0x1d8] sm:$0xff]
    %v137 = vld [vmem:[%s2 + $0x1e0] sm:$0xff]
    %v138 = vld [vmem:[%s2 + $0x1e8] sm:$0xff]
    %v139 = vld [vmem:[%s2 + $0x1f0] sm:$0xff]
    %v140 = vld [vmem:[%s2 + $0x1f8] sm:$0xff]
    %v141 = vld [vmem:[%s2 + $0x200] sm:$0xff]
    %v142 = vld [vmem:[%s2 + $0x208] sm:$0xff]
    %v143 = vld [vmem:[%s2 + $0x210] sm:$0xff]
    %v144 = vld [vmem:[%s2 + $0x218] sm:$0xff]
    %v145 = vld [vmem:[%s2 + $0x220] sm:$0xff]
    %v146 = vld [vmem:[%s2 + $0x228] sm:$0xff]
    %v147 = vld [vmem:[%s2 + $0x230] sm:$0xff]
    %v148 = vld [vmem:[%s2 + $0x238] sm:$0xff]
    %v149 = vld [vmem:[%s2 + $0x240] sm:$0xff]
    %v150 = vld [vmem:[%s2 + $0x248] sm:$0xff]
    %v151 = vld [vmem:[%s2 + $0x250] sm:$0xff]
    %v152 = vld [vmem:[%s2 + $0x258] sm:$0xff]
    %v153 = vld [vmem:[%s2 + $0x260] sm:$0xff]
    %v154 = vld [vmem:[%s2 + $0x268] sm:$0xff]
    %v155 = vld [vmem:[%s2 + $0x270] sm:$0xff]
    %v156 = vld [vmem:[%s2 + $0x278] sm:$0xff]
    %v157 = vld [vmem:[%s2 + $0x280] sm:$0xff]
    %v158 = vld [vmem:[%s2 + $0x288] sm:$0xff]
    %v159 = vld [vmem:[%s2 + $0x290] sm:$0xff]
    %v160 = vld [vmem:[%s2 + $0x298] sm:$0xff]
    %v161 = vld [vmem:[%s2 + $0x2a0] sm:$0xff]
    %v162 = vld [vmem:[%s2 + $0x2a8] sm:$0xff]
    %v163 = vld [vmem:[%s2 + $0x2b0] sm:$0xff]
    %v164 = vld [vmem:[%s2 + $0x2b8] sm:$0xff]
    %v165 = vld [vmem:[%s2 + $0x2c0] sm:$0xff]
    %v166 = vld [vmem:[%s2 + $0x2c8] sm:$0xff]
    %v167 = vld [vmem:[%s2 + $0x2d0] sm:$0xff]
    %v168 = vld [vmem:[%s2 + $0x2d8] sm:$0xff]
    %v169 = vld [vmem:[%s2 + $0x2e0] sm:$0xff]
    %v170 = vld [vmem:[%s2 + $0x2e8] sm:$0xff]
    %v171 = vld [vmem:[%s2 + $0x2f0] sm:$0xff]
    %v172 = vld [vmem:[%s2 + $0x2f8] sm:$0xff]
    %v173 = vld [vmem:[%s2 + $0x300] sm:$0xff]
    %v174 = vld [vmem:[%s2 + $0x308] sm:$0xff]
    %v175 = vld [vmem:[%s2 + $0x310] sm:$0xff]
    %v176 = vld [vmem:[%s2 + $0x318] sm:$0xff]
    %v177 = vld [vmem:[%s2 + $0x320] sm:$0xff]
    %v178 = vld [vmem:[%s2 + $0x328] sm:$0xff]
    %v179 = vld [vmem:[%s2 + $0x330] sm:$0xff]
    %v180 = vld [vmem:[%s2 + $0x338] sm:$0xff]
    %v181 = vld [vmem:[%s2 + $0x340] sm:$0xff]
    %v182 = vld [vmem:[%s2 + $0x348] sm:$0xff]
    %v183 = vld [vmem:[%s2 + $0x350] sm:$0xff]
    %v184 = vld [vmem:[%s2 + $0x358] sm:$0xff]
    %v185 = vld [vmem:[%s2 + $0x360] sm:$0xff]
    %v186 = vld [vmem:[%s2 + $0x368] sm:$0xff]
    %v187 = vld [vmem:[%s2 + $0x370] sm:$0xff]
    %v188 = vld [vmem:[%s2 + $0x378] sm:$0xff]
    %v189 = vld [vmem:[%s2 + $0x380] sm:$0xff]
    %v190 = vld [vmem:[%s2 + $0x388] sm:$0xff]
    %v191 = vld [vmem:[%s2 + $0x390] sm:$0xff]
    %v192 = vld [vmem:[%s2 + $0x398] sm:$0xff]
    %v193 = vld [vmem:[%s2 + $0x3a0] sm:$0xff]
    %v194 = vld [vmem:[%s2 + $0x3a8] sm:$0xff]
    %v195 = vld [vmem:[%s2 + $0x3b0] sm:$0xff]
    %v196 = vld [vmem:[%s2 + $0x3b8] sm:$0xff]
    %v197 = vld [vmem:[%s2 + $0x3c0] sm:$0xff]
    %v198 = vld [vmem:[%s2 + $0x3c8] sm:$0xff]
    %v199 = vld [vmem:[%s2 + $0x3d0] sm:$0xff]
    %v200 = vld [vmem:[%s2 + $0x3d8] sm:$0xff]
    %v201 = vld [vmem:[%s2 + $0x3e0] sm:$0xff]
    %v202 = vld [vmem:[%s2 + $0x3e8] sm:$0xff]
    %v203 = vld [vmem:[%s2 + $0x3f0] sm:$0xff]
    %v204 = vld [vmem:[%s2 + $0x3f8] sm:$0xff]
    %vm205 = vcmask 261120
    %v207 = vsel %vm205, %v77, 0
    %v210 = vsel %vm205, %v78, 0
    %v213 = vsel %vm205, %v79, 0
    %v216 = vsel %vm205, %v80, 0
    %v219 = vsel %vm205, %v81, 0
    %v222 = vsel %vm205, %v82, 0
    %v225 = vsel %vm205, %v83, 0
    %v228 = vsel %vm205, %v84, 0
    %v231 = vsel %vm205, %v85, 0
    %v234 = vsel %vm205, %v86, 0
    %v237 = vsel %vm205, %v87, 0
    %v240 = vsel %vm205, %v88, 0
    %v243 = vsel %vm205, %v89, 0
    %v246 = vsel %vm205, %v90, 0
    %v249 = vsel %vm205, %v91, 0
    %v252 = vsel %vm205, %v92, 0
    %v255 = vsel %vm205, %v93, 0
    %v258 = vsel %vm205, %v94, 0
    %v261 = vsel %vm205, %v95, 0
    %v264 = vsel %vm205, %v96, 0
    %v267 = vsel %vm205, %v97, 0
    %v270 = vsel %vm205, %v98, 0
    %v273 = vsel %vm205, %v99, 0
    %v276 = vsel %vm205, %v100, 0
    %v279 = vsel %vm205, %v101, 0
    %v282 = vsel %vm205, %v102, 0
    %v285 = vsel %vm205, %v103, 0
    %v288 = vsel %vm205, %v104, 0
    %v291 = vsel %vm205, %v105, 0
    %v294 = vsel %vm205, %v106, 0
    %v297 = vsel %vm205, %v107, 0
    %v300 = vsel %vm205, %v108, 0
    %v303 = vsel %vm205, %v109, 0
    %v306 = vsel %vm205, %v110, 0
    %v309 = vsel %vm205, %v111, 0
    %v312 = vsel %vm205, %v112, 0
    %v315 = vsel %vm205, %v113, 0
    %v318 = vsel %vm205, %v114, 0
    %v321 = vsel %vm205, %v115, 0
    %v324 = vsel %vm205, %v116, 0
    %v327 = vsel %vm205, %v117, 0
    %v330 = vsel %vm205, %v118, 0
    %v333 = vsel %vm205, %v119, 0
    %v336 = vsel %vm205, %v120, 0
    %v339 = vsel %vm205, %v121, 0
    %v342 = vsel %vm205, %v122, 0
    %v345 = vsel %vm205, %v123, 0
    %v348 = vsel %vm205, %v124, 0
    %v351 = vsel %vm205, %v125, 0
    %v354 = vsel %vm205, %v126, 0
    %v357 = vsel %vm205, %v127, 0
    %v360 = vsel %vm205, %v128, 0
    %v363 = vsel %vm205, %v129, 0
    %v366 = vsel %vm205, %v130, 0
    %v369 = vsel %vm205, %v131, 0
    %v372 = vsel %vm205, %v132, 0
    %v375 = vsel %vm205, %v133, 0
    %v378 = vsel %vm205, %v134, 0
    %v381 = vsel %vm205, %v135, 0
    %v384 = vsel %vm205, %v136, 0
    %v387 = vsel %vm205, %v137, 0
    %v390 = vsel %vm205, %v138, 0
    %v393 = vsel %vm205, %v139, 0
    %v396 = vsel %vm205, %v140, 0
    %v399 = vsel %vm205, %v141, 0
    %v402 = vsel %vm205, %v142, 0
    %v405 = vsel %vm205, %v143, 0
    %v408 = vsel %vm205, %v144, 0
    %v411 = vsel %vm205, %v145, 0
    %v414 = vsel %vm205, %v146, 0
    %v417 = vsel %vm205, %v147, 0
    %v420 = vsel %vm205, %v148, 0
    %v423 = vsel %vm205, %v149, 0
    %v426 = vsel %vm205, %v150, 0
    %v429 = vsel %vm205, %v151, 0
    %v432 = vsel %vm205, %v152, 0
    %v435 = vsel %vm205, %v153, 0
    %v438 = vsel %vm205, %v154, 0
    %v441 = vsel %vm205, %v155, 0
    %v444 = vsel %vm205, %v156, 0
    %v447 = vsel %vm205, %v157, 0
    %v450 = vsel %vm205, %v158, 0
    %v453 = vsel %vm205, %v159, 0
    %v456 = vsel %vm205, %v160, 0
    %v459 = vsel %vm205, %v161, 0
    %v462 = vsel %vm205, %v162, 0
    %v465 = vsel %vm205, %v163, 0
    %v468 = vsel %vm205, %v164, 0
    %v471 = vsel %vm205, %v165, 0
    %v474 = vsel %vm205, %v166, 0
    %v477 = vsel %vm205, %v167, 0
    %v480 = vsel %vm205, %v168, 0
    %v483 = vsel %vm205, %v169, 0
    %v486 = vsel %vm205, %v170, 0
    %v489 = vsel %vm205, %v171, 0
    %v492 = vsel %vm205, %v172, 0
    %v495 = vsel %vm205, %v173, 0
    %v498 = vsel %vm205, %v174, 0
    %v501 = vsel %vm205, %v175, 0
    %v504 = vsel %vm205, %v176, 0
    %v507 = vsel %vm205, %v177, 0
    %v510 = vsel %vm205, %v178, 0
    %v513 = vsel %vm205, %v179, 0
    %v516 = vsel %vm205, %v180, 0
    %v519 = vsel %vm205, %v181, 0
    %v522 = vsel %vm205, %v182, 0
    %v525 = vsel %vm205, %v183, 0
    %v528 = vsel %vm205, %v184, 0
    %v531 = vsel %vm205, %v185, 0
    %v534 = vsel %vm205, %v186, 0
    %v537 = vsel %vm205, %v187, 0
    %v540 = vsel %vm205, %v188, 0
    %v543 = vsel %vm205, %v189, 0
    %v546 = vsel %vm205, %v190, 0
    %v549 = vsel %vm205, %v191, 0
    %v552 = vsel %vm205, %v192, 0
    %v555 = vsel %vm205, %v193, 0
    %v558 = vsel %vm205, %v194, 0
    %v561 = vsel %vm205, %v195, 0
    %v564 = vsel %vm205, %v196, 0
    %v567 = vsel %vm205, %v197, 0
    %v570 = vsel %vm205, %v198, 0
    %v573 = vsel %vm205, %v199, 0
    %v576 = vsel %vm205, %v200, 0
    %v579 = vsel %vm205, %v201, 0
    %v582 = vsel %vm205, %v202, 0
    %v585 = vsel %vm205, %v203, 0
    %v588 = vsel %vm205, %v204, 0
    %v591 = vsel %vm205, %v45, 0
    %v594 = vsel %vm205, %v46, 0
    %v597 = vsel %vm205, %v47, 0
    %v600 = vsel %vm205, %v48, 0
    %v603 = vsel %vm205, %v49, 0
    %v606 = vsel %vm205, %v50, 0
    %v609 = vsel %vm205, %v51, 0
    %v612 = vsel %vm205, %v52, 0
    %v615 = vsel %vm205, %v53, 0
    %v618 = vsel %vm205, %v54, 0
    %v621 = vsel %vm205, %v55, 0
    %v624 = vsel %vm205, %v56, 0
    %v627 = vsel %vm205, %v57, 0
    %v630 = vsel %vm205, %v58, 0
    %v633 = vsel %vm205, %v59, 0
    %v636 = vsel %vm205, %v60, 0
    %638 = vmatpush.xpose.msra.mxu0 %v636
    %639 = vmatpush.xpose.msra.mxu0 %v633
    %640 = vmatpush.xpose.msra.mxu0 %v630
    %641 = vmatpush.xpose.msra.mxu0 %v627
    %642 = vmatpush.xpose.msra.mxu0 %v624
    %643 = vmatpush.xpose.msra.mxu0 %v621
    %644 = vmatpush.xpose.msra.mxu0 %v618
    %645 = vmatpush.xpose.msra.mxu0 %v615
    %646 = vmatpush.xpose.msra.mxu0 %v612
    %647 = vmatpush.xpose.msra.mxu0 %v609
    %648 = vmatpush.xpose.msra.mxu0 %v606
    %649 = vmatpush.xpose.msra.mxu0 %v603
    %650 = vmatpush.xpose.msra.mxu0 %v600
    %651 = vmatpush.xpose.msra.mxu0 %v597
    %652 = vmatpush.xpose.msra.mxu0 %v594
    %653 = vmatpush.xpose.msra.mxu0 %v591
    %654 = vmatmul.f32.gmra.mxu0 %v207
    %v655 = vpop.f32.mrf.mxu0
    %v656 = vadd.f32 0.0, %v655
    %657 = vmatmul.f32.gmra.mxu0 %v210
    %v658 = vpop.f32.mrf.mxu0
    %v659 = vadd.f32 0.0, %v658
    %660 = vmatmul.f32.gmra.mxu0 %v213
    %v661 = vpop.f32.mrf.mxu0
    %v662 = vadd.f32 0.0, %v661
    %663 = vmatmul.f32.gmra.mxu0 %v216
    %v664 = vpop.f32.mrf.mxu0
    %v665 = vadd.f32 0.0, %v664
    %666 = vmatmul.f32.gmra.mxu0 %v219
    %v667 = vpop.f32.mrf.mxu0
    %v668 = vadd.f32 0.0, %v667
    %669 = vmatmul.f32.gmra.mxu0 %v222
    %v670 = vpop.f32.mrf.mxu0
    %v671 = vadd.f32 0.0, %v670
    %672 = vmatmul.f32.gmra.mxu0 %v225
    %v673 = vpop.f32.mrf.mxu0
    %v674 = vadd.f32 0.0, %v673
    %675 = vmatmul.f32.gmra.mxu0 %v228
    %v676 = vpop.f32.mrf.mxu0
    %v677 = vadd.f32 0.0, %v676
    %678 = vmatmul.f32.gmra.mxu0 %v231
    %v679 = vpop.f32.mrf.mxu0
    %v680 = vadd.f32 0.0, %v679
    %681 = vmatmul.f32.gmra.mxu0 %v234
    %v682 = vpop.f32.mrf.mxu0
    %v683 = vadd.f32 0.0, %v682
    %684 = vmatmul.f32.gmra.mxu0 %v237
    %v685 = vpop.f32.mrf.mxu0
    %v686 = vadd.f32 0.0, %v685
    %687 = vmatmul.f32.gmra.mxu0 %v240
    %v688 = vpop.f32.mrf.mxu0
    %v689 = vadd.f32 0.0, %v688
    %690 = vmatmul.f32.gmra.mxu0 %v243
    %v691 = vpop.f32.mrf.mxu0
    %v692 = vadd.f32 0.0, %v691
    %693 = vmatmul.f32.gmra.mxu0 %v246
    %v694 = vpop.f32.mrf.mxu0
    %v695 = vadd.f32 0.0, %v694
    %696 = vmatmul.f32.gmra.mxu0 %v249
    %v697 = vpop.f32.mrf.mxu0
    %v698 = vadd.f32 0.0, %v697
    %699 = vmatmul.f32.gmra.mxu0 %v252
    %v700 = vpop.f32.mrf.mxu0
    %v701 = vadd.f32 0.0, %v700
    %702 = vmatmul.f32.gmra.mxu0 %v255
    %v703 = vpop.f32.mrf.mxu0
    %v704 = vadd.f32 0.0, %v703
    %705 = vmatmul.f32.gmra.mxu0 %v258
    %v706 = vpop.f32.mrf.mxu0
    %v707 = vadd.f32 0.0, %v706
    %708 = vmatmul.f32.gmra.mxu0 %v261
    %v709 = vpop.f32.mrf.mxu0
    %v710 = vadd.f32 0.0, %v709
    %711 = vmatmul.f32.gmra.mxu0 %v264
    %v712 = vpop.f32.mrf.mxu0
    %v713 = vadd.f32 0.0, %v712
    %714 = vmatmul.f32.gmra.mxu0 %v267
    %v715 = vpop.f32.mrf.mxu0
    %v716 = vadd.f32 0.0, %v715
    %717 = vmatmul.f32.gmra.mxu0 %v270
    %v718 = vpop.f32.mrf.mxu0
    %v719 = vadd.f32 0.0, %v718
    %720 = vmatmul.f32.gmra.mxu0 %v273
    %v721 = vpop.f32.mrf.mxu0
    %v722 = vadd.f32 0.0, %v721
    %723 = vmatmul.f32.gmra.mxu0 %v276
    %v724 = vpop.f32.mrf.mxu0
    %v725 = vadd.f32 0.0, %v724
    %726 = vmatmul.f32.gmra.mxu0 %v279
    %v727 = vpop.f32.mrf.mxu0
    %v728 = vadd.f32 0.0, %v727
    %729 = vmatmul.f32.gmra.mxu0 %v282
    %v730 = vpop.f32.mrf.mxu0
    %v731 = vadd.f32 0.0, %v730
    %732 = vmatmul.f32.gmra.mxu0 %v285
    %v733 = vpop.f32.mrf.mxu0
    %v734 = vadd.f32 0.0, %v733
    %735 = vmatmul.f32.gmra.mxu0 %v288
    %v736 = vpop.f32.mrf.mxu0
    %v737 = vadd.f32 0.0, %v736
    %738 = vmatmul.f32.gmra.mxu0 %v291
    %v739 = vpop.f32.mrf.mxu0
    %v740 = vadd.f32 0.0, %v739
    %741 = vmatmul.f32.gmra.mxu0 %v294
    %v742 = vpop.f32.mrf.mxu0
    %v743 = vadd.f32 0.0, %v742
    %744 = vmatmul.f32.gmra.mxu0 %v297
    %v745 = vpop.f32.mrf.mxu0
    %v746 = vadd.f32 0.0, %v745
    %747 = vmatmul.f32.gmra.mxu0 %v300
    %v748 = vpop.f32.mrf.mxu0
    %v749 = vadd.f32 0.0, %v748
    %750 = vmatmul.f32.gmra.mxu0 %v303
    %v751 = vpop.f32.mrf.mxu0
    %v752 = vadd.f32 0.0, %v751
    %753 = vmatmul.f32.gmra.mxu0 %v306
    %v754 = vpop.f32.mrf.mxu0
    %v755 = vadd.f32 0.0, %v754
    %756 = vmatmul.f32.gmra.mxu0 %v309
    %v757 = vpop.f32.mrf.mxu0
    %v758 = vadd.f32 0.0, %v757
    %759 = vmatmul.f32.gmra.mxu0 %v312
    %v760 = vpop.f32.mrf.mxu0
    %v761 = vadd.f32 0.0, %v760
    %762 = vmatmul.f32.gmra.mxu0 %v315
    %v763 = vpop.f32.mrf.mxu0
    %v764 = vadd.f32 0.0, %v763
    %765 = vmatmul.f32.gmra.mxu0 %v318
    %v766 = vpop.f32.mrf.mxu0
    %v767 = vadd.f32 0.0, %v766
    %768 = vmatmul.f32.gmra.mxu0 %v321
    %v769 = vpop.f32.mrf.mxu0
    %v770 = vadd.f32 0.0, %v769
    %771 = vmatmul.f32.gmra.mxu0 %v324
    %v772 = vpop.f32.mrf.mxu0
    %v773 = vadd.f32 0.0, %v772
    %774 = vmatmul.f32.gmra.mxu0 %v327
    %v775 = vpop.f32.mrf.mxu0
    %v776 = vadd.f32 0.0, %v775
    %777 = vmatmul.f32.gmra.mxu0 %v330
    %v778 = vpop.f32.mrf.mxu0
    %v779 = vadd.f32 0.0, %v778
    %780 = vmatmul.f32.gmra.mxu0 %v333
    %v781 = vpop.f32.mrf.mxu0
    %v782 = vadd.f32 0.0, %v781
    %783 = vmatmul.f32.gmra.mxu0 %v336
    %v784 = vpop.f32.mrf.mxu0
    %v785 = vadd.f32 0.0, %v784
    %786 = vmatmul.f32.gmra.mxu0 %v339
    %v787 = vpop.f32.mrf.mxu0
    %v788 = vadd.f32 0.0, %v787
    %789 = vmatmul.f32.gmra.mxu0 %v342
    %v790 = vpop.f32.mrf.mxu0
    %v791 = vadd.f32 0.0, %v790
    %792 = vmatmul.f32.gmra.mxu0 %v345
    %v793 = vpop.f32.mrf.mxu0
    %v794 = vadd.f32 0.0, %v793
    %795 = vmatmul.f32.gmra.mxu0 %v348
    %v796 = vpop.f32.mrf.mxu0
    %v797 = vadd.f32 0.0, %v796
    %798 = vmatmul.f32.gmra.mxu0 %v351
    %v799 = vpop.f32.mrf.mxu0
    %v800 = vadd.f32 0.0, %v799
    %801 = vmatmul.f32.gmra.mxu0 %v354
    %v802 = vpop.f32.mrf.mxu0
    %v803 = vadd.f32 0.0, %v802
    %804 = vmatmul.f32.gmra.mxu0 %v357
    %v805 = vpop.f32.mrf.mxu0
    %v806 = vadd.f32 0.0, %v805
    %807 = vmatmul.f32.gmra.mxu0 %v360
    %v808 = vpop.f32.mrf.mxu0
    %v809 = vadd.f32 0.0, %v808
    %810 = vmatmul.f32.gmra.mxu0 %v363
    %v811 = vpop.f32.mrf.mxu0
    %v812 = vadd.f32 0.0, %v811
    %813 = vmatmul.f32.gmra.mxu0 %v366
    %v814 = vpop.f32.mrf.mxu0
    %v815 = vadd.f32 0.0, %v814
    %816 = vmatmul.f32.gmra.mxu0 %v369
    %v817 = vpop.f32.mrf.mxu0
    %v818 = vadd.f32 0.0, %v817
    %819 = vmatmul.f32.gmra.mxu0 %v372
    %v820 = vpop.f32.mrf.mxu0
    %v821 = vadd.f32 0.0, %v820
    %822 = vmatmul.f32.gmra.mxu0 %v375
    %v823 = vpop.f32.mrf.mxu0
    %v824 = vadd.f32 0.0, %v823
    %825 = vmatmul.f32.gmra.mxu0 %v378
    %v826 = vpop.f32.mrf.mxu0
    %v827 = vadd.f32 0.0, %v826
    %828 = vmatmul.f32.gmra.mxu0 %v381
    %v829 = vpop.f32.mrf.mxu0
    %v830 = vadd.f32 0.0, %v829
    %831 = vmatmul.f32.gmra.mxu0 %v384
    %v832 = vpop.f32.mrf.mxu0
    %v833 = vadd.f32 0.0, %v832
    %834 = vmatmul.f32.gmra.mxu0 %v387
    %v835 = vpop.f32.mrf.mxu0
    %v836 = vadd.f32 0.0, %v835
    %837 = vmatmul.f32.gmra.mxu0 %v390
    %v838 = vpop.f32.mrf.mxu0
    %v839 = vadd.f32 0.0, %v838
    %840 = vmatmul.f32.gmra.mxu0 %v393
    %v841 = vpop.f32.mrf.mxu0
    %v842 = vadd.f32 0.0, %v841
    %843 = vmatmul.f32.gmra.mxu0 %v396
    %v844 = vpop.f32.mrf.mxu0
    %v845 = vadd.f32 0.0, %v844
    %846 = vmatmul.f32.gmra.mxu0 %v399
    %v847 = vpop.f32.mrf.mxu0
    %v848 = vadd.f32 0.0, %v847
    %849 = vmatmul.f32.gmra.mxu0 %v402
    %v850 = vpop.f32.mrf.mxu0
    %v851 = vadd.f32 0.0, %v850
    %852 = vmatmul.f32.gmra.mxu0 %v405
    %v853 = vpop.f32.mrf.mxu0
    %v854 = vadd.f32 0.0, %v853
    %855 = vmatmul.f32.gmra.mxu0 %v408
    %v856 = vpop.f32.mrf.mxu0
    %v857 = vadd.f32 0.0, %v856
    %858 = vmatmul.f32.gmra.mxu0 %v411
    %v859 = vpop.f32.mrf.mxu0
    %v860 = vadd.f32 0.0, %v859
    %861 = vmatmul.f32.gmra.mxu0 %v414
    %v862 = vpop.f32.mrf.mxu0
    %v863 = vadd.f32 0.0, %v862
    %864 = vmatmul.f32.gmra.mxu0 %v417
    %v865 = vpop.f32.mrf.mxu0
    %v866 = vadd.f32 0.0, %v865
    %867 = vmatmul.f32.gmra.mxu0 %v420
    %v868 = vpop.f32.mrf.mxu0
    %v869 = vadd.f32 0.0, %v868
    %870 = vmatmul.f32.gmra.mxu0 %v423
    %v871 = vpop.f32.mrf.mxu0
    %v872 = vadd.f32 0.0, %v871
    %873 = vmatmul.f32.gmra.mxu0 %v426
    %v874 = vpop.f32.mrf.mxu0
    %v875 = vadd.f32 0.0, %v874
    %876 = vmatmul.f32.gmra.mxu0 %v429
    %v877 = vpop.f32.mrf.mxu0
    %v878 = vadd.f32 0.0, %v877
    %879 = vmatmul.f32.gmra.mxu0 %v432
    %v880 = vpop.f32.mrf.mxu0
    %v881 = vadd.f32 0.0, %v880
    %882 = vmatmul.f32.gmra.mxu0 %v435
    %v883 = vpop.f32.mrf.mxu0
    %v884 = vadd.f32 0.0, %v883
    %885 = vmatmul.f32.gmra.mxu0 %v438
    %v886 = vpop.f32.mrf.mxu0
    %v887 = vadd.f32 0.0, %v886
    %888 = vmatmul.f32.gmra.mxu0 %v441
    %v889 = vpop.f32.mrf.mxu0
    %v890 = vadd.f32 0.0, %v889
    %891 = vmatmul.f32.gmra.mxu0 %v444
    %v892 = vpop.f32.mrf.mxu0
    %v893 = vadd.f32 0.0, %v892
    %894 = vmatmul.f32.gmra.mxu0 %v447
    %v895 = vpop.f32.mrf.mxu0
    %v896 = vadd.f32 0.0, %v895
    %897 = vmatmul.f32.gmra.mxu0 %v450
    %v898 = vpop.f32.mrf.mxu0
    %v899 = vadd.f32 0.0, %v898
    %900 = vmatmul.f32.gmra.mxu0 %v453
    %v901 = vpop.f32.mrf.mxu0
    %v902 = vadd.f32 0.0, %v901
    %903 = vmatmul.f32.gmra.mxu0 %v456
    %v904 = vpop.f32.mrf.mxu0
    %v905 = vadd.f32 0.0, %v904
    %906 = vmatmul.f32.gmra.mxu0 %v459
    %v907 = vpop.f32.mrf.mxu0
    %v908 = vadd.f32 0.0, %v907
    %909 = vmatmul.f32.gmra.mxu0 %v462
    %v910 = vpop.f32.mrf.mxu0
    %v911 = vadd.f32 0.0, %v910
    %912 = vmatmul.f32.gmra.mxu0 %v465
    %v913 = vpop.f32.mrf.mxu0
    %v914 = vadd.f32 0.0, %v913
    %915 = vmatmul.f32.gmra.mxu0 %v468
    %v916 = vpop.f32.mrf.mxu0
    %v917 = vadd.f32 0.0, %v916
    %918 = vmatmul.f32.gmra.mxu0 %v471
    %v919 = vpop.f32.mrf.mxu0
    %v920 = vadd.f32 0.0, %v919
    %921 = vmatmul.f32.gmra.mxu0 %v474
    %v922 = vpop.f32.mrf.mxu0
    %v923 = vadd.f32 0.0, %v922
    %924 = vmatmul.f32.gmra.mxu0 %v477
    %v925 = vpop.f32.mrf.mxu0
    %v926 = vadd.f32 0.0, %v925
    %927 = vmatmul.f32.gmra.mxu0 %v480
    %v928 = vpop.f32.mrf.mxu0
    %v929 = vadd.f32 0.0, %v928
    %930 = vmatmul.f32.gmra.mxu0 %v483
    %v931 = vpop.f32.mrf.mxu0
    %v932 = vadd.f32 0.0, %v931
    %933 = vmatmul.f32.gmra.mxu0 %v486
    %v934 = vpop.f32.mrf.mxu0
    %v935 = vadd.f32 0.0, %v934
    %936 = vmatmul.f32.gmra.mxu0 %v489
    %v937 = vpop.f32.mrf.mxu0
    %v938 = vadd.f32 0.0, %v937
    %939 = vmatmul.f32.gmra.mxu0 %v492
    %v940 = vpop.f32.mrf.mxu0
    %v941 = vadd.f32 0.0, %v940
    %942 = vmatmul.f32.gmra.mxu0 %v495
    %v943 = vpop.f32.mrf.mxu0
    %v944 = vadd.f32 0.0, %v943
    %945 = vmatmul.f32.gmra.mxu0 %v498
    %v946 = vpop.f32.mrf.mxu0
    %v947 = vadd.f32 0.0, %v946
    %948 = vmatmul.f32.gmra.mxu0 %v501
    %v949 = vpop.f32.mrf.mxu0
    %v950 = vadd.f32 0.0, %v949
    %951 = vmatmul.f32.gmra.mxu0 %v504
    %v952 = vpop.f32.mrf.mxu0
    %v953 = vadd.f32 0.0, %v952
    %954 = vmatmul.f32.gmra.mxu0 %v507
    %v955 = vpop.f32.mrf.mxu0
    %v956 = vadd.f32 0.0, %v955
    %957 = vmatmul.f32.gmra.mxu0 %v510
    %v958 = vpop.f32.mrf.mxu0
    %v959 = vadd.f32 0.0, %v958
    %960 = vmatmul.f32.gmra.mxu0 %v513
    %v961 = vpop.f32.mrf.mxu0
    %v962 = vadd.f32 0.0, %v961
    %963 = vmatmul.f32.gmra.mxu0 %v516
    %v964 = vpop.f32.mrf.mxu0
    %v965 = vadd.f32 0.0, %v964
    %966 = vmatmul.f32.gmra.mxu0 %v519
    %v967 = vpop.f32.mrf.mxu0
    %v968 = vadd.f32 0.0, %v967
    %969 = vmatmul.f32.gmra.mxu0 %v522
    %v970 = vpop.f32.mrf.mxu0
    %v971 = vadd.f32 0.0, %v970
    %972 = vmatmul.f32.gmra.mxu0 %v525
    %v973 = vpop.f32.mrf.mxu0
    %v974 = vadd.f32 0.0, %v973
    %975 = vmatmul.f32.gmra.mxu0 %v528
    %v976 = vpop.f32.mrf.mxu0
    %v977 = vadd.f32 0.0, %v976
    %978 = vmatmul.f32.gmra.mxu0 %v531
    %v979 = vpop.f32.mrf.mxu0
    %v980 = vadd.f32 0.0, %v979
    %981 = vmatmul.f32.gmra.mxu0 %v534
    %v982 = vpop.f32.mrf.mxu0
    %v983 = vadd.f32 0.0, %v982
    %984 = vmatmul.f32.gmra.mxu0 %v537
    %v985 = vpop.f32.mrf.mxu0
    %v986 = vadd.f32 0.0, %v985
    %987 = vmatmul.f32.gmra.mxu0 %v540
    %v988 = vpop.f32.mrf.mxu0
    %v989 = vadd.f32 0.0, %v988
    %990 = vmatmul.f32.gmra.mxu0 %v543
    %v991 = vpop.f32.mrf.mxu0
    %v992 = vadd.f32 0.0, %v991
    %993 = vmatmul.f32.gmra.mxu0 %v546
    %v994 = vpop.f32.mrf.mxu0
    %v995 = vadd.f32 0.0, %v994
    %996 = vmatmul.f32.gmra.mxu0 %v549
    %v997 = vpop.f32.mrf.mxu0
    %v998 = vadd.f32 0.0, %v997
    %999 = vmatmul.f32.gmra.mxu0 %v552
    %v1000 = vpop.f32.mrf.mxu0
    %v1001 = vadd.f32 0.0, %v1000
    %1002 = vmatmul.f32.gmra.mxu0 %v555
    %v1003 = vpop.f32.mrf.mxu0
    %v1004 = vadd.f32 0.0, %v1003
    %1005 = vmatmul.f32.gmra.mxu0 %v558
    %v1006 = vpop.f32.mrf.mxu0
    %v1007 = vadd.f32 0.0, %v1006
    %1008 = vmatmul.f32.gmra.mxu0 %v561
    %v1009 = vpop.f32.mrf.mxu0
    %v1010 = vadd.f32 0.0, %v1009
    %1011 = vmatmul.f32.gmra.mxu0 %v564
    %v1012 = vpop.f32.mrf.mxu0
    %v1013 = vadd.f32 0.0, %v1012
    %1014 = vmatmul.f32.gmra.mxu0 %v567
    %v1015 = vpop.f32.mrf.mxu0
    %v1016 = vadd.f32 0.0, %v1015
    %1017 = vmatmul.f32.gmra.mxu0 %v570
    %v1018 = vpop.f32.mrf.mxu0
    %v1019 = vadd.f32 0.0, %v1018
    %1020 = vmatmul.f32.gmra.mxu0 %v573
    %v1021 = vpop.f32.mrf.mxu0
    %v1022 = vadd.f32 0.0, %v1021
    %1023 = vmatmul.f32.gmra.mxu0 %v576
    %v1024 = vpop.f32.mrf.mxu0
    %v1025 = vadd.f32 0.0, %v1024
    %1026 = vmatmul.f32.gmra.mxu0 %v579
    %v1027 = vpop.f32.mrf.mxu0
    %v1028 = vadd.f32 0.0, %v1027
    %1029 = vmatmul.f32.gmra.mxu0 %v582
    %v1030 = vpop.f32.mrf.mxu0
    %v1031 = vadd.f32 0.0, %v1030
    %1032 = vmatmul.f32.gmra.mxu0 %v585
    %v1033 = vpop.f32.mrf.mxu0
    %v1034 = vadd.f32 0.0, %v1033
    %1035 = vmatmul.f32.gmra.mxu0 %v588
    %v1036 = vpop.f32.mrf.mxu0
    %v1037 = vadd.f32 0.0, %v1036
    %1038 = vdwg.mxu0
    %v1039 = vld [vmem:[%s3] sm:$0xff]
    %v1040 = vld [vmem:[%s3 + $0x8] sm:$0xff]
    %v1041 = vld [vmem:[%s3 + $0x10] sm:$0xff]
    %v1042 = vld [vmem:[%s3 + $0x18] sm:$0xff]
    %v1043 = vld [vmem:[%s4] sm:$0xff]
    %v1044 = vld [vmem:[%s4 + $0x8] sm:$0xff]
    %v1045 = vld [vmem:[%s4 + $0x10] sm:$0xff]
    %v1046 = vld [vmem:[%s4 + $0x18] sm:$0xff]
    %1048 = vset.pattern.permute.xlu0 0
    %1049 = vperm.xlu0 %1048, %v1043
    %v1050 = vpop.permute.xlu0 %1049
    %1053 = vset.pattern.permute.xlu0 0
    %1054 = vperm.xlu0 %1053, %v1044
    %v1055 = vpop.permute.xlu0 %1054
    %1058 = vset.pattern.permute.xlu0 0
    %1059 = vperm.xlu0 %1058, %v1045
    %v1060 = vpop.permute.xlu0 %1059
    %1063 = vset.pattern.permute.xlu0 0
    %1064 = vperm.xlu0 %1063, %v1046
    %v1065 = vpop.permute.xlu0 %1064
    %vm1067 = vcmask 64512
    %v1069 = vsel %vm1067, %v1039, 0
    %v1072 = vsel %vm1067, %v1040, 0
    %v1075 = vsel %vm1067, %v1041, 0
    %v1078 = vsel %vm1067, %v1042, 0
    %v1081 = vsel %vm1067, %v61, 0
    %v1084 = vsel %vm1067, %v62, 0
    %v1087 = vsel %vm1067, %v63, 0
    %v1090 = vsel %vm1067, %v64, 0
    %v1093 = vsel %vm1067, %v65, 0
    %v1096 = vsel %vm1067, %v66, 0
    %v1099 = vsel %vm1067, %v67, 0
    %v1102 = vsel %vm1067, %v68, 0
    %v1105 = vsel %vm1067, %v69, 0
    %v1108 = vsel %vm1067, %v70, 0
    %v1111 = vsel %vm1067, %v71, 0
    %v1114 = vsel %vm1067, %v72, 0
    %v1117 = vsel %vm1067, %v73, 0
    %v1120 = vsel %vm1067, %v74, 0
    %v1123 = vsel %vm1067, %v75, 0
    %v1126 = vsel %vm1067, %v76, 0
    %1128 = vmatpush.xpose.msra.mxu0 %v1126
    %1129 = vmatpush.xpose.msra.mxu0 %v1123
    %1130 = vmatpush.xpose.msra.mxu0 %v1120
    %1131 = vmatpush.xpose.msra.mxu0 %v1117
    %1132 = vmatpush.xpose.msra.mxu0 %v1114
    %1133 = vmatpush.xpose.msra.mxu0 %v1111
    %1134 = vmatpush.xpose.msra.mxu0 %v1108
    %1135 = vmatpush.xpose.msra.mxu0 %v1105
    %1136 = vmatpush.xpose.msra.mxu0 %v1102
    %1137 = vmatpush.xpose.msra.mxu0 %v1099
    %1138 = vmatpush.xpose.msra.mxu0 %v1096
    %1139 = vmatpush.xpose.msra.mxu0 %v1093
    %1140 = vmatpush.xpose.msra.mxu0 %v1090
    %1141 = vmatpush.xpose.msra.mxu0 %v1087
    %1142 = vmatpush.xpose.msra.mxu0 %v1084
    %1143 = vmatpush.xpose.msra.mxu0 %v1081
    %1144 = vmatmul.f32.gmra.mxu0 %v1069
    %v1145 = vpop.f32.mrf.mxu0
    %v1146 = vadd.f32 %v1050, %v1145
    %1147 = vmatmul.f32.gmra.mxu0 %v1072
    %v1148 = vpop.f32.mrf.mxu0
    %v1149 = vadd.f32 %v1055, %v1148
    %1150 = vmatmul.f32.gmra.mxu0 %v1075
    %v1151 = vpop.f32.mrf.mxu0
    %v1152 = vadd.f32 %v1060, %v1151
    %1153 = vmatmul.f32.gmra.mxu0 %v1078
    %v1154 = vpop.f32.mrf.mxu0
    %v1155 = vadd.f32 %v1065, %v1154
    %1156 = vdwg.mxu0
    %v1157 = vtanh.pop %v1146
    %v1158 = vtanh.pop %v1149
    %v1159 = vtanh.pop %v1152
    %v1160 = vtanh.pop %v1155
    %v1161 = vld [vmem:[%s5] sm:$0xff]
    %v1162 = vld [vmem:[%s5 + $0x8] sm:$0xff]
    %v1163 = vld [vmem:[%s5 + $0x10] sm:$0xff]
    %v1164 = vld [vmem:[%s5 + $0x18] sm:$0xff]
    %v1165 = vld [vmem:[%s6] sm:$0xff]
    %v1166 = vld [vmem:[%s6 + $0x8] sm:$0xff]
    %v1167 = vld [vmem:[%s6 + $0x10] sm:$0xff]
    %v1168 = vld [vmem:[%s6 + $0x18] sm:$0xff]
    %1170 = vset.pattern.permute.xlu0 0
    %1171 = vperm.xlu0 %1170, %v1165
    %v1172 = vpop.permute.xlu0 %1171
    %1175 = vset.pattern.permute.xlu0 0
    %1176 = vperm.xlu0 %1175, %v1166
    %v1177 = vpop.permute.xlu0 %1176
    %1180 = vset.pattern.permute.xlu0 0
    %1181 = vperm.xlu0 %1180, %v1167
    %v1182 = vpop.permute.xlu0 %1181
    %1185 = vset.pattern.permute.xlu0 0
    %1186 = vperm.xlu0 %1185, %v1168
    %v1187 = vpop.permute.xlu0 %1186
    %v1190 = vsel %vm205, %v1161, 0
    %v1193 = vsel %vm205, %v1162, 0
    %v1196 = vsel %vm205, %v1163, 0
    %v1199 = vsel %vm205, %v1164, 0
    %1201 = vmatpush.msra.mxu0 0.0
    %1202 = vmatpush.msra.mxu0 0.0
    %1203 = vmatpush.msra.mxu0 0.0
    %1204 = vmatpush.msra.mxu0 0.0
    %1205 = vmatpush.msra.mxu0 0.0
    %1206 = vmatpush.msra.mxu0 0.0
    %1207 = vmatpush.msra.mxu0 0.0
    %1208 = vmatpush.msra.mxu0 0.0
    %1209 = vmatpush.msra.mxu0 0.0
    %1210 = vmatpush.msra.mxu0 0.0
    %1211 = vmatpush.msra.mxu0 0.0
    %1212 = vmatpush.msra.mxu0 0.0
    %1213 = vmatpush.msra.mxu0 %v1160
    %1214 = vmatpush.msra.mxu0 %v1159
    %1215 = vmatpush.msra.mxu0 %v1158
    %1216 = vmatpush.msra.mxu0 %v1157
    %1217 = vmatmul.f32.gmra.mxu0 %v1190
    %v1218 = vpop.f32.mrf.mxu0
    %v1219 = vadd.f32 %v1172, %v1218
    %1220 = vmatmul.f32.gmra.mxu0 %v1193
    %v1221 = vpop.f32.mrf.mxu0
    %v1222 = vadd.f32 %v1177, %v1221
    %1223 = vmatmul.f32.gmra.mxu0 %v1196
    %v1224 = vpop.f32.mrf.mxu0
    %v1225 = vadd.f32 %v1182, %v1224
    %1226 = vmatmul.f32.gmra.mxu0 %v1199
    %v1227 = vpop.f32.mrf.mxu0
    %v1228 = vadd.f32 %v1187, %v1227
    %1229 = vdwg.mxu0
    %v1230 = vtanh.pop %v1219
    %v1231 = vtanh.pop %v1222
    %v1232 = vtanh.pop %v1225
    %v1233 = vtanh.pop %v1228
    %v1234 = vld [vmem:[%s7] sm:$0xff]
    %v1235 = vld [vmem:[%s7 + $0x8] sm:$0xff]
    %v1236 = vld [vmem:[%s7 + $0x10] sm:$0xff]
    %v1237 = vld [vmem:[%s7 + $0x18] sm:$0xff]
    %v1238 = vld [vmem:[%s8] sm:$0xff]
    %v1239 = vld [vmem:[%s8 + $0x8] sm:$0xff]
    %v1240 = vld [vmem:[%s8 + $0x10] sm:$0xff]
    %v1241 = vld [vmem:[%s8 + $0x18] sm:$0xff]
    %1243 = vset.pattern.permute.xlu0 0
    %1244 = vperm.xlu0 %1243, %v1238
    %v1245 = vpop.permute.xlu0 %1244
    %1248 = vset.pattern.permute.xlu0 0
    %1249 = vperm.xlu0 %1248, %v1239
    %v1250 = vpop.permute.xlu0 %1249
    %1253 = vset.pattern.permute.xlu0 0
    %1254 = vperm.xlu0 %1253, %v1240
    %v1255 = vpop.permute.xlu0 %1254
    %1258 = vset.pattern.permute.xlu0 0
    %1259 = vperm.xlu0 %1258, %v1241
    %v1260 = vpop.permute.xlu0 %1259
    %v1263 = vsel %vm205, %v1234, 0
    %v1266 = vsel %vm205, %v1235, 0
    %v1269 = vsel %vm205, %v1236, 0
    %v1272 = vsel %vm205, %v1237, 0
    %1274 = vmatpush.msra.mxu0 0.0
    %1275 = vmatpush.msra.mxu0 0.0
    %1276 = vmatpush.msra.mxu0 0.0
    %1277 = vmatpush.msra.mxu0 0.0
    %1278 = vmatpush.msra.mxu0 0.0
    %1279 = vmatpush.msra.mxu0 0.0
    %1280 = vmatpush.msra.mxu0 0.0
    %1281 = vmatpush.msra.mxu0 0.0
    %1282 = vmatpush.msra.mxu0 0.0
    %1283 = vmatpush.msra.mxu0 0.0
    %1284 = vmatpush.msra.mxu0 0.0
    %1285 = vmatpush.msra.mxu0 0.0
    %1286 = vmatpush.msra.mxu0 %v1233
    %1287 = vmatpush.msra.mxu0 %v1232
    %1288 = vmatpush.msra.mxu0 %v1231
    %1289 = vmatpush.msra.mxu0 %v1230
    %1290 = vmatmul.f32.gmra.mxu0 %v1263
    %v1291 = vpop.f32.mrf.mxu0
    %v1292 = vadd.f32 %v1245, %v1291
    %1293 = vmatmul.f32.gmra.mxu0 %v1266
    %v1294 = vpop.f32.mrf.mxu0
    %v1295 = vadd.f32 %v1250, %v1294
    %1296 = vmatmul.f32.gmra.mxu0 %v1269
    %v1297 = vpop.f32.mrf.mxu0
    %v1298 = vadd.f32 %v1255, %v1297
    %1299 = vmatmul.f32.gmra.mxu0 %v1272
    %v1300 = vpop.f32.mrf.mxu0
    %v1301 = vadd.f32 %v1260, %v1300
    %1302 = vdwg.mxu0
    %v1303 = vtanh.pop %v1292
    %v1304 = vtanh.pop %v1295
    %v1305 = vtanh.pop %v1298
    %v1306 = vtanh.pop %v1301
    %v1307 = vld [vmem:[%s9] sm:$0xff]
    %v1308 = vld [vmem:[%s9 + $0x8] sm:$0xff]
    %v1309 = vld [vmem:[%s9 + $0x10] sm:$0xff]
    %v1310 = vld [vmem:[%s9 + $0x18] sm:$0xff]
    %v1311 = vld [vmem:[%s10] sm:$0xff]
    %v1312 = vld [vmem:[%s10 + $0x8] sm:$0xff]
    %v1313 = vld [vmem:[%s10 + $0x10] sm:$0xff]
    %v1314 = vld [vmem:[%s10 + $0x18] sm:$0xff]
    %1316 = vset.pattern.permute.xlu0 0
    %1317 = vperm.xlu0 %1316, %v1311
    %v1318 = vpop.permute.xlu0 %1317
    %1321 = vset.pattern.permute.xlu0 0
    %1322 = vperm.xlu0 %1321, %v1312
    %v1323 = vpop.permute.xlu0 %1322
    %1326 = vset.pattern.permute.xlu0 0
    %1327 = vperm.xlu0 %1326, %v1313
    %v1328 = vpop.permute.xlu0 %1327
    %1331 = vset.pattern.permute.xlu0 0
    %1332 = vperm.xlu0 %1331, %v1314
    %v1333 = vpop.permute.xlu0 %1332
    %v1336 = vsel %vm205, %v1307, 0
    %v1339 = vsel %vm205, %v1308, 0
    %v1342 = vsel %vm205, %v1309, 0
    %v1345 = vsel %vm205, %v1310, 0
    %1347 = vmatpush.msra.mxu0 0.0
    %1348 = vmatpush.msra.mxu0 0.0
    %1349 = vmatpush.msra.mxu0 0.0
    %1350 = vmatpush.msra.mxu0 0.0
    %1351 = vmatpush.msra.mxu0 0.0
    %1352 = vmatpush.msra.mxu0 0.0
    %1353 = vmatpush.msra.mxu0 0.0
    %1354 = vmatpush.msra.mxu0 0.0
    %1355 = vmatpush.msra.mxu0 0.0
    %1356 = vmatpush.msra.mxu0 0.0
    %1357 = vmatpush.msra.mxu0 0.0
    %1358 = vmatpush.msra.mxu0 0.0
    %1359 = vmatpush.msra.mxu0 %v1306
    %1360 = vmatpush.msra.mxu0 %v1305
    %1361 = vmatpush.msra.mxu0 %v1304
    %1362 = vmatpush.msra.mxu0 %v1303
    %1363 = vmatmul.f32.gmra.mxu0 %v1336
    %v1364 = vpop.f32.mrf.mxu0
    %v1365 = vadd.f32 %v1318, %v1364
    %1366 = vmatmul.f32.gmra.mxu0 %v1339
    %v1367 = vpop.f32.mrf.mxu0
    %v1368 = vadd.f32 %v1323, %v1367
    %1369 = vmatmul.f32.gmra.mxu0 %v1342
    %v1370 = vpop.f32.mrf.mxu0
    %v1371 = vadd.f32 %v1328, %v1370
    %1372 = vmatmul.f32.gmra.mxu0 %v1345
    %v1373 = vpop.f32.mrf.mxu0
    %v1374 = vadd.f32 %v1333, %v1373
    %1375 = vdwg.mxu0
    %v1376 = vtanh.pop %v1365
    %v1377 = vtanh.pop %v1368
    %v1378 = vtanh.pop %v1371
    %v1379 = vtanh.pop %v1374
    %v1380 = vld [vmem:[%s11] sm:$0xff]
    %v1381 = vld [vmem:[%s11 + $0x8] sm:$0xff]
    %v1382 = vld [vmem:[%s11 + $0x10] sm:$0xff]
    %v1383 = vld [vmem:[%s11 + $0x18] sm:$0xff]
    %v1384 = vld [vmem:[%s11 + $0x20] sm:$0xff]
    %v1385 = vld [vmem:[%s11 + $0x28] sm:$0xff]
    %v1386 = vld [vmem:[%s11 + $0x30] sm:$0xff]
    %v1387 = vld [vmem:[%s11 + $0x38] sm:$0xff]
    %v1388 = vld [vmem:[%s11 + $0x40] sm:$0xff]
    %v1389 = vld [vmem:[%s11 + $0x48] sm:$0xff]
    %v1390 = vld [vmem:[%s11 + $0x50] sm:$0xff]
    %v1391 = vld [vmem:[%s11 + $0x58] sm:$0xff]
    %v1392 = vld [vmem:[%s11 + $0x60] sm:$0xff]
    %v1393 = vld [vmem:[%s11 + $0x68] sm:$0xff]
    %v1394 = vld [vmem:[%s11 + $0x70] sm:$0xff]
    %v1395 = vld [vmem:[%s11 + $0x78] sm:$0xff]
    %v1396 = vld [vmem:[%s11 + $0x80] sm:$0xff]
    %v1397 = vld [vmem:[%s11 + $0x88] sm:$0xff]
    %v1398 = vld [vmem:[%s11 + $0x90] sm:$0xff]
    %v1399 = vld [vmem:[%s11 + $0x98] sm:$0xff]
    %v1400 = vld [vmem:[%s11 + $0xa0] sm:$0xff]
    %v1401 = vld [vmem:[%s11 + $0xa8] sm:$0xff]
    %v1402 = vld [vmem:[%s11 + $0xb0] sm:$0xff]
    %v1403 = vld [vmem:[%s11 + $0xb8] sm:$0xff]
    %v1404 = vld [vmem:[%s11 + $0xc0] sm:$0xff]
    %v1405 = vld [vmem:[%s11 + $0xc8] sm:$0xff]
    %v1406 = vld [vmem:[%s11 + $0xd0] sm:$0xff]
    %v1407 = vld [vmem:[%s11 + $0xd8] sm:$0xff]
    %v1408 = vld [vmem:[%s11 + $0xe0] sm:$0xff]
    %v1409 = vld [vmem:[%s11 + $0xe8] sm:$0xff]
    %v1410 = vld [vmem:[%s11 + $0xf0] sm:$0xff]
    %v1411 = vld [vmem:[%s11 + $0xf8] sm:$0xff]
    %v1412 = vld [vmem:[%s11 + $0x100] sm:$0xff]
    %v1413 = vld [vmem:[%s11 + $0x108] sm:$0xff]
    %v1414 = vld [vmem:[%s11 + $0x110] sm:$0xff]
    %v1415 = vld [vmem:[%s11 + $0x118] sm:$0xff]
    %v1416 = vld [vmem:[%s11 + $0x120] sm:$0xff]
    %v1417 = vld [vmem:[%s11 + $0x128] sm:$0xff]
    %v1418 = vld [vmem:[%s11 + $0x130] sm:$0xff]
    %v1419 = vld [vmem:[%s11 + $0x138] sm:$0xff]
    %v1420 = vld [vmem:[%s11 + $0x140] sm:$0xff]
    %v1421 = vld [vmem:[%s11 + $0x148] sm:$0xff]
    %v1422 = vld [vmem:[%s11 + $0x150] sm:$0xff]
    %v1423 = vld [vmem:[%s11 + $0x158] sm:$0xff]
    %v1424 = vld [vmem:[%s11 + $0x160] sm:$0xff]
    %v1425 = vld [vmem:[%s11 + $0x168] sm:$0xff]
    %v1426 = vld [vmem:[%s11 + $0x170] sm:$0xff]
    %v1427 = vld [vmem:[%s11 + $0x178] sm:$0xff]
    %v1428 = vld [vmem:[%s11 + $0x180] sm:$0xff]
    %v1429 = vld [vmem:[%s11 + $0x188] sm:$0xff]
    %v1430 = vld [vmem:[%s11 + $0x190] sm:$0xff]
    %v1431 = vld [vmem:[%s11 + $0x198] sm:$0xff]
    %v1432 = vld [vmem:[%s11 + $0x1a0] sm:$0xff]
    %v1433 = vld [vmem:[%s11 + $0x1a8] sm:$0xff]
    %v1434 = vld [vmem:[%s11 + $0x1b0] sm:$0xff]
    %v1435 = vld [vmem:[%s11 + $0x1b8] sm:$0xff]
    %v1436 = vld [vmem:[%s11 + $0x1c0] sm:$0xff]
    %v1437 = vld [vmem:[%s11 + $0x1c8] sm:$0xff]
    %v1438 = vld [vmem:[%s11 + $0x1d0] sm:$0xff]
    %v1439 = vld [vmem:[%s11 + $0x1d8] sm:$0xff]
    %v1440 = vld [vmem:[%s11 + $0x1e0] sm:$0xff]
    %v1441 = vld [vmem:[%s11 + $0x1e8] sm:$0xff]
    %v1442 = vld [vmem:[%s11 + $0x1f0] sm:$0xff]
    %v1443 = vld [vmem:[%s11 + $0x1f8] sm:$0xff]
    %v1444 = vld [vmem:[%s11 + $0x200] sm:$0xff]
    %v1445 = vld [vmem:[%s11 + $0x208] sm:$0xff]
    %v1446 = vld [vmem:[%s11 + $0x210] sm:$0xff]
    %v1447 = vld [vmem:[%s11 + $0x218] sm:$0xff]
    %v1448 = vld [vmem:[%s11 + $0x220] sm:$0xff]
    %v1449 = vld [vmem:[%s11 + $0x228] sm:$0xff]
    %v1450 = vld [vmem:[%s11 + $0x230] sm:$0xff]
    %v1451 = vld [vmem:[%s11 + $0x238] sm:$0xff]
    %v1452 = vld [vmem:[%s11 + $0x240] sm:$0xff]
    %v1453 = vld [vmem:[%s11 + $0x248] sm:$0xff]
    %v1454 = vld [vmem:[%s11 + $0x250] sm:$0xff]
    %v1455 = vld [vmem:[%s11 + $0x258] sm:$0xff]
    %v1456 = vld [vmem:[%s11 + $0x260] sm:$0xff]
    %v1457 = vld [vmem:[%s11 + $0x268] sm:$0xff]
    %v1458 = vld [vmem:[%s11 + $0x270] sm:$0xff]
    %v1459 = vld [vmem:[%s11 + $0x278] sm:$0xff]
    %v1460 = vld [vmem:[%s11 + $0x280] sm:$0xff]
    %v1461 = vld [vmem:[%s11 + $0x288] sm:$0xff]
    %v1462 = vld [vmem:[%s11 + $0x290] sm:$0xff]
    %v1463 = vld [vmem:[%s11 + $0x298] sm:$0xff]
    %v1464 = vld [vmem:[%s11 + $0x2a0] sm:$0xff]
    %v1465 = vld [vmem:[%s11 + $0x2a8] sm:$0xff]
    %v1466 = vld [vmem:[%s11 + $0x2b0] sm:$0xff]
    %v1467 = vld [vmem:[%s11 + $0x2b8] sm:$0xff]
    %v1468 = vld [vmem:[%s11 + $0x2c0] sm:$0xff]
    %v1469 = vld [vmem:[%s11 + $0x2c8] sm:$0xff]
    %v1470 = vld [vmem:[%s11 + $0x2d0] sm:$0xff]
    %v1471 = vld [vmem:[%s11 + $0x2d8] sm:$0xff]
    %v1472 = vld [vmem:[%s11 + $0x2e0] sm:$0xff]
    %v1473 = vld [vmem:[%s11 + $0x2e8] sm:$0xff]
    %v1474 = vld [vmem:[%s11 + $0x2f0] sm:$0xff]
    %v1475 = vld [vmem:[%s11 + $0x2f8] sm:$0xff]
    %v1476 = vld [vmem:[%s11 + $0x300] sm:$0xff]
    %v1477 = vld [vmem:[%s11 + $0x308] sm:$0xff]
    %v1478 = vld [vmem:[%s11 + $0x310] sm:$0xff]
    %v1479 = vld [vmem:[%s11 + $0x318] sm:$0xff]
    %v1480 = vld [vmem:[%s11 + $0x320] sm:$0xff]
    %v1481 = vld [vmem:[%s11 + $0x328] sm:$0xff]
    %v1482 = vld [vmem:[%s11 + $0x330] sm:$0xff]
    %v1483 = vld [vmem:[%s11 + $0x338] sm:$0xff]
    %v1484 = vld [vmem:[%s11 + $0x340] sm:$0xff]
    %v1485 = vld [vmem:[%s11 + $0x348] sm:$0xff]
    %v1486 = vld [vmem:[%s11 + $0x350] sm:$0xff]
    %v1487 = vld [vmem:[%s11 + $0x358] sm:$0xff]
    %v1488 = vld [vmem:[%s11 + $0x360] sm:$0xff]
    %v1489 = vld [vmem:[%s11 + $0x368] sm:$0xff]
    %v1490 = vld [vmem:[%s11 + $0x370] sm:$0xff]
    %v1491 = vld [vmem:[%s11 + $0x378] sm:$0xff]
    %v1492 = vld [vmem:[%s11 + $0x380] sm:$0xff]
    %v1493 = vld [vmem:[%s11 + $0x388] sm:$0xff]
    %v1494 = vld [vmem:[%s11 + $0x390] sm:$0xff]
    %v1495 = vld [vmem:[%s11 + $0x398] sm:$0xff]
    %v1496 = vld [vmem:[%s11 + $0x3a0] sm:$0xff]
    %v1497 = vld [vmem:[%s11 + $0x3a8] sm:$0xff]
    %v1498 = vld [vmem:[%s11 + $0x3b0] sm:$0xff]
    %v1499 = vld [vmem:[%s11 + $0x3b8] sm:$0xff]
    %v1500 = vld [vmem:[%s11 + $0x3c0] sm:$0xff]
    %v1501 = vld [vmem:[%s11 + $0x3c8] sm:$0xff]
    %v1502 = vld [vmem:[%s11 + $0x3d0] sm:$0xff]
    %v1503 = vld [vmem:[%s11 + $0x3d8] sm:$0xff]
    %v1504 = vld [vmem:[%s11 + $0x3e0] sm:$0xff]
    %v1505 = vld [vmem:[%s11 + $0x3e8] sm:$0xff]
    %v1506 = vld [vmem:[%s11 + $0x3f0] sm:$0xff]
    %v1507 = vld [vmem:[%s11 + $0x3f8] sm:$0xff]
    %v1508 = vld [vmem:[%s12] sm:$0xff]
    %v1509 = vld [vmem:[%s12 + $0x8] sm:$0xff]
    %v1510 = vld [vmem:[%s12 + $0x10] sm:$0xff]
    %v1511 = vld [vmem:[%s12 + $0x18] sm:$0xff]
    %v1512 = vld [vmem:[%s12 + $0x20] sm:$0xff]
    %v1513 = vld [vmem:[%s12 + $0x28] sm:$0xff]
    %v1514 = vld [vmem:[%s12 + $0x30] sm:$0xff]
    %v1515 = vld [vmem:[%s12 + $0x38] sm:$0xff]
    %v1516 = vld [vmem:[%s12 + $0x40] sm:$0xff]
    %v1517 = vld [vmem:[%s12 + $0x48] sm:$0xff]
    %v1518 = vld [vmem:[%s12 + $0x50] sm:$0xff]
    %v1519 = vld [vmem:[%s12 + $0x58] sm:$0xff]
    %v1520 = vld [vmem:[%s12 + $0x60] sm:$0xff]
    %v1521 = vld [vmem:[%s12 + $0x68] sm:$0xff]
    %v1522 = vld [vmem:[%s12 + $0x70] sm:$0xff]
    %v1523 = vld [vmem:[%s12 + $0x78] sm:$0xff]
    %v1524 = vld [vmem:[%s12 + $0x80] sm:$0xff]
    %v1525 = vld [vmem:[%s12 + $0x88] sm:$0xff]
    %v1526 = vld [vmem:[%s12 + $0x90] sm:$0xff]
    %v1527 = vld [vmem:[%s12 + $0x98] sm:$0xff]
    %v1528 = vld [vmem:[%s12 + $0xa0] sm:$0xff]
    %v1529 = vld [vmem:[%s12 + $0xa8] sm:$0xff]
    %v1530 = vld [vmem:[%s12 + $0xb0] sm:$0xff]
    %v1531 = vld [vmem:[%s12 + $0xb8] sm:$0xff]
    %v1532 = vld [vmem:[%s12 + $0xc0] sm:$0xff]
    %v1533 = vld [vmem:[%s12 + $0xc8] sm:$0xff]
    %v1534 = vld [vmem:[%s12 + $0xd0] sm:$0xff]
    %v1535 = vld [vmem:[%s12 + $0xd8] sm:$0xff]
    %v1536 = vld [vmem:[%s12 + $0xe0] sm:$0xff]
    %v1537 = vld [vmem:[%s12 + $0xe8] sm:$0xff]
    %v1538 = vld [vmem:[%s12 + $0xf0] sm:$0xff]
    %v1539 = vld [vmem:[%s12 + $0xf8] sm:$0xff]
    %v1540 = vld [vmem:[%s12 + $0x100] sm:$0xff]
    %v1541 = vld [vmem:[%s12 + $0x108] sm:$0xff]
    %v1542 = vld [vmem:[%s12 + $0x110] sm:$0xff]
    %v1543 = vld [vmem:[%s12 + $0x118] sm:$0xff]
    %v1544 = vld [vmem:[%s12 + $0x120] sm:$0xff]
    %v1545 = vld [vmem:[%s12 + $0x128] sm:$0xff]
    %v1546 = vld [vmem:[%s12 + $0x130] sm:$0xff]
    %v1547 = vld [vmem:[%s12 + $0x138] sm:$0xff]
    %v1548 = vld [vmem:[%s12 + $0x140] sm:$0xff]
    %v1549 = vld [vmem:[%s12 + $0x148] sm:$0xff]
    %v1550 = vld [vmem:[%s12 + $0x150] sm:$0xff]
    %v1551 = vld [vmem:[%s12 + $0x158] sm:$0xff]
    %v1552 = vld [vmem:[%s12 + $0x160] sm:$0xff]
    %v1553 = vld [vmem:[%s12 + $0x168] sm:$0xff]
    %v1554 = vld [vmem:[%s12 + $0x170] sm:$0xff]
    %v1555 = vld [vmem:[%s12 + $0x178] sm:$0xff]
    %v1556 = vld [vmem:[%s12 + $0x180] sm:$0xff]
    %v1557 = vld [vmem:[%s12 + $0x188] sm:$0xff]
    %v1558 = vld [vmem:[%s12 + $0x190] sm:$0xff]
    %v1559 = vld [vmem:[%s12 + $0x198] sm:$0xff]
    %v1560 = vld [vmem:[%s12 + $0x1a0] sm:$0xff]
    %v1561 = vld [vmem:[%s12 + $0x1a8] sm:$0xff]
    %v1562 = vld [vmem:[%s12 + $0x1b0] sm:$0xff]
    %v1563 = vld [vmem:[%s12 + $0x1b8] sm:$0xff]
    %v1564 = vld [vmem:[%s12 + $0x1c0] sm:$0xff]
    %v1565 = vld [vmem:[%s12 + $0x1c8] sm:$0xff]
    %v1566 = vld [vmem:[%s12 + $0x1d0] sm:$0xff]
    %v1567 = vld [vmem:[%s12 + $0x1d8] sm:$0xff]
    %v1568 = vld [vmem:[%s12 + $0x1e0] sm:$0xff]
    %v1569 = vld [vmem:[%s12 + $0x1e8] sm:$0xff]
    %v1570 = vld [vmem:[%s12 + $0x1f0] sm:$0xff]
    %v1571 = vld [vmem:[%s12 + $0x1f8] sm:$0xff]
    %v1572 = vld [vmem:[%s12 + $0x200] sm:$0xff]
    %v1573 = vld [vmem:[%s12 + $0x208] sm:$0xff]
    %v1574 = vld [vmem:[%s12 + $0x210] sm:$0xff]
    %v1575 = vld [vmem:[%s12 + $0x218] sm:$0xff]
    %v1576 = vld [vmem:[%s12 + $0x220] sm:$0xff]
    %v1577 = vld [vmem:[%s12 + $0x228] sm:$0xff]
    %v1578 = vld [vmem:[%s12 + $0x230] sm:$0xff]
    %v1579 = vld [vmem:[%s12 + $0x238] sm:$0xff]
    %v1580 = vld [vmem:[%s12 + $0x240] sm:$0xff]
    %v1581 = vld [vmem:[%s12 + $0x248] sm:$0xff]
    %v1582 = vld [vmem:[%s12 + $0x250] sm:$0xff]
    %v1583 = vld [vmem:[%s12 + $0x258] sm:$0xff]
    %v1584 = vld [vmem:[%s12 + $0x260] sm:$0xff]
    %v1585 = vld [vmem:[%s12 + $0x268] sm:$0xff]
    %v1586 = vld [vmem:[%s12 + $0x270] sm:$0xff]
    %v1587 = vld [vmem:[%s12 + $0x278] sm:$0xff]
    %v1588 = vld [vmem:[%s12 + $0x280] sm:$0xff]
    %v1589 = vld [vmem:[%s12 + $0x288] sm:$0xff]
    %v1590 = vld [vmem:[%s12 + $0x290] sm:$0xff]
    %v1591 = vld [vmem:[%s12 + $0x298] sm:$0xff]
    %v1592 = vld [vmem:[%s12 + $0x2a0] sm:$0xff]
    %v1593 = vld [vmem:[%s12 + $0x2a8] sm:$0xff]
    %v1594 = vld [vmem:[%s12 + $0x2b0] sm:$0xff]
    %v1595 = vld [vmem:[%s12 + $0x2b8] sm:$0xff]
    %v1596 = vld [vmem:[%s12 + $0x2c0] sm:$0xff]
    %v1597 = vld [vmem:[%s12 + $0x2c8] sm:$0xff]
    %v1598 = vld [vmem:[%s12 + $0x2d0] sm:$0xff]
    %v1599 = vld [vmem:[%s12 + $0x2d8] sm:$0xff]
    %v1600 = vld [vmem:[%s12 + $0x2e0] sm:$0xff]
    %v1601 = vld [vmem:[%s12 + $0x2e8] sm:$0xff]
    %v1602 = vld [vmem:[%s12 + $0x2f0] sm:$0xff]
    %v1603 = vld [vmem:[%s12 + $0x2f8] sm:$0xff]
    %v1604 = vld [vmem:[%s12 + $0x300] sm:$0xff]
    %v1605 = vld [vmem:[%s12 + $0x308] sm:$0xff]
    %v1606 = vld [vmem:[%s12 + $0x310] sm:$0xff]
    %v1607 = vld [vmem:[%s12 + $0x318] sm:$0xff]
    %v1608 = vld [vmem:[%s12 + $0x320] sm:$0xff]
    %v1609 = vld [vmem:[%s12 + $0x328] sm:$0xff]
    %v1610 = vld [vmem:[%s12 + $0x330] sm:$0xff]
    %v1611 = vld [vmem:[%s12 + $0x338] sm:$0xff]
    %v1612 = vld [vmem:[%s12 + $0x340] sm:$0xff]
    %v1613 = vld [vmem:[%s12 + $0x348] sm:$0xff]
    %v1614 = vld [vmem:[%s12 + $0x350] sm:$0xff]
    %v1615 = vld [vmem:[%s12 + $0x358] sm:$0xff]
    %v1616 = vld [vmem:[%s12 + $0x360] sm:$0xff]
    %v1617 = vld [vmem:[%s12 + $0x368] sm:$0xff]
    %v1618 = vld [vmem:[%s12 + $0x370] sm:$0xff]
    %v1619 = vld [vmem:[%s12 + $0x378] sm:$0xff]
    %v1620 = vld [vmem:[%s12 + $0x380] sm:$0xff]
    %v1621 = vld [vmem:[%s12 + $0x388] sm:$0xff]
    %v1622 = vld [vmem:[%s12 + $0x390] sm:$0xff]
    %v1623 = vld [vmem:[%s12 + $0x398] sm:$0xff]
    %v1624 = vld [vmem:[%s12 + $0x3a0] sm:$0xff]
    %v1625 = vld [vmem:[%s12 + $0x3a8] sm:$0xff]
    %v1626 = vld [vmem:[%s12 + $0x3b0] sm:$0xff]
    %v1627 = vld [vmem:[%s12 + $0x3b8] sm:$0xff]
    %v1628 = vld [vmem:[%s12 + $0x3c0] sm:$0xff]
    %v1629 = vld [vmem:[%s12 + $0x3c8] sm:$0xff]
    %v1630 = vld [vmem:[%s12 + $0x3d0] sm:$0xff]
    %v1631 = vld [vmem:[%s12 + $0x3d8] sm:$0xff]
    %v1632 = vld [vmem:[%s12 + $0x3e0] sm:$0xff]
    %v1633 = vld [vmem:[%s12 + $0x3e8] sm:$0xff]
    %v1634 = vld [vmem:[%s12 + $0x3f0] sm:$0xff]
    %v1635 = vld [vmem:[%s12 + $0x3f8] sm:$0xff]
    %1637 = vset.pattern.permute.xlu0 0
    %1638 = vperm.xlu0 %1637, %v1508
    %v1639 = vpop.permute.xlu0 %1638
    %1642 = vset.pattern.permute.xlu0 0
    %1643 = vperm.xlu0 %1642, %v1509
    %v1644 = vpop.permute.xlu0 %1643
    %1647 = vset.pattern.permute.xlu0 0
    %1648 = vperm.xlu0 %1647, %v1510
    %v1649 = vpop.permute.xlu0 %1648
    %1652 = vset.pattern.permute.xlu0 0
    %1653 = vperm.xlu0 %1652, %v1511
    %v1654 = vpop.permute.xlu0 %1653
    %1657 = vset.pattern.permute.xlu0 0
    %1658 = vperm.xlu0 %1657, %v1512
    %v1659 = vpop.permute.xlu0 %1658
    %1662 = vset.pattern.permute.xlu0 0
    %1663 = vperm.xlu0 %1662, %v1513
    %v1664 = vpop.permute.xlu0 %1663
    %1667 = vset.pattern.permute.xlu0 0
    %1668 = vperm.xlu0 %1667, %v1514
    %v1669 = vpop.permute.xlu0 %1668
    %1672 = vset.pattern.permute.xlu0 0
    %1673 = vperm.xlu0 %1672, %v1515
    %v1674 = vpop.permute.xlu0 %1673
    %1677 = vset.pattern.permute.xlu0 0
    %1678 = vperm.xlu0 %1677, %v1516
    %v1679 = vpop.permute.xlu0 %1678
    %1682 = vset.pattern.permute.xlu0 0
    %1683 = vperm.xlu0 %1682, %v1517
    %v1684 = vpop.permute.xlu0 %1683
    %1687 = vset.pattern.permute.xlu0 0
    %1688 = vperm.xlu0 %1687, %v1518
    %v1689 = vpop.permute.xlu0 %1688
    %1692 = vset.pattern.permute.xlu0 0
    %1693 = vperm.xlu0 %1692, %v1519
    %v1694 = vpop.permute.xlu0 %1693
    %1697 = vset.pattern.permute.xlu0 0
    %1698 = vperm.xlu0 %1697, %v1520
    %v1699 = vpop.permute.xlu0 %1698
    %1702 = vset.pattern.permute.xlu0 0
    %1703 = vperm.xlu0 %1702, %v1521
    %v1704 = vpop.permute.xlu0 %1703
    %1707 = vset.pattern.permute.xlu0 0
    %1708 = vperm.xlu0 %1707, %v1522
    %v1709 = vpop.permute.xlu0 %1708
    %1712 = vset.pattern.permute.xlu0 0
    %1713 = vperm.xlu0 %1712, %v1523
    %v1714 = vpop.permute.xlu0 %1713
    %1717 = vset.pattern.permute.xlu0 0
    %1718 = vperm.xlu0 %1717, %v1524
    %v1719 = vpop.permute.xlu0 %1718
    %1722 = vset.pattern.permute.xlu0 0
    %1723 = vperm.xlu0 %1722, %v1525
    %v1724 = vpop.permute.xlu0 %1723
    %1727 = vset.pattern.permute.xlu0 0
    %1728 = vperm.xlu0 %1727, %v1526
    %v1729 = vpop.permute.xlu0 %1728
    %1732 = vset.pattern.permute.xlu0 0
    %1733 = vperm.xlu0 %1732, %v1527
    %v1734 = vpop.permute.xlu0 %1733
    %1737 = vset.pattern.permute.xlu0 0
    %1738 = vperm.xlu0 %1737, %v1528
    %v1739 = vpop.permute.xlu0 %1738
    %1742 = vset.pattern.permute.xlu0 0
    %1743 = vperm.xlu0 %1742, %v1529
    %v1744 = vpop.permute.xlu0 %1743
    %1747 = vset.pattern.permute.xlu0 0
    %1748 = vperm.xlu0 %1747, %v1530
    %v1749 = vpop.permute.xlu0 %1748
    %1752 = vset.pattern.permute.xlu0 0
    %1753 = vperm.xlu0 %1752, %v1531
    %v1754 = vpop.permute.xlu0 %1753
    %1757 = vset.pattern.permute.xlu0 0
    %1758 = vperm.xlu0 %1757, %v1532
    %v1759 = vpop.permute.xlu0 %1758
    %1762 = vset.pattern.permute.xlu0 0
    %1763 = vperm.xlu0 %1762, %v1533
    %v1764 = vpop.permute.xlu0 %1763
    %1767 = vset.pattern.permute.xlu0 0
    %1768 = vperm.xlu0 %1767, %v1534
    %v1769 = vpop.permute.xlu0 %1768
    %1772 = vset.pattern.permute.xlu0 0
    %1773 = vperm.xlu0 %1772, %v1535
    %v1774 = vpop.permute.xlu0 %1773
    %1777 = vset.pattern.permute.xlu0 0
    %1778 = vperm.xlu0 %1777, %v1536
    %v1779 = vpop.permute.xlu0 %1778
    %1782 = vset.pattern.permute.xlu0 0
    %1783 = vperm.xlu0 %1782, %v1537
    %v1784 = vpop.permute.xlu0 %1783
    %1787 = vset.pattern.permute.xlu0 0
    %1788 = vperm.xlu0 %1787, %v1538
    %v1789 = vpop.permute.xlu0 %1788
    %1792 = vset.pattern.permute.xlu0 0
    %1793 = vperm.xlu0 %1792, %v1539
    %v1794 = vpop.permute.xlu0 %1793
    %1797 = vset.pattern.permute.xlu0 0
    %1798 = vperm.xlu0 %1797, %v1540
    %v1799 = vpop.permute.xlu0 %1798
    %1802 = vset.pattern.permute.xlu0 0
    %1803 = vperm.xlu0 %1802, %v1541
    %v1804 = vpop.permute.xlu0 %1803
    %1807 = vset.pattern.permute.xlu0 0
    %1808 = vperm.xlu0 %1807, %v1542
    %v1809 = vpop.permute.xlu0 %1808
    %1812 = vset.pattern.permute.xlu0 0
    %1813 = vperm.xlu0 %1812, %v1543
    %v1814 = vpop.permute.xlu0 %1813
    %1817 = vset.pattern.permute.xlu0 0
    %1818 = vperm.xlu0 %1817, %v1544
    %v1819 = vpop.permute.xlu0 %1818
    %1822 = vset.pattern.permute.xlu0 0
    %1823 = vperm.xlu0 %1822, %v1545
    %v1824 = vpop.permute.xlu0 %1823
    %1827 = vset.pattern.permute.xlu0 0
    %1828 = vperm.xlu0 %1827, %v1546
    %v1829 = vpop.permute.xlu0 %1828
    %1832 = vset.pattern.permute.xlu0 0
    %1833 = vperm.xlu0 %1832, %v1547
    %v1834 = vpop.permute.xlu0 %1833
    %1837 = vset.pattern.permute.xlu0 0
    %1838 = vperm.xlu0 %1837, %v1548
    %v1839 = vpop.permute.xlu0 %1838
    %1842 = vset.pattern.permute.xlu0 0
    %1843 = vperm.xlu0 %1842, %v1549
    %v1844 = vpop.permute.xlu0 %1843
    %1847 = vset.pattern.permute.xlu0 0
    %1848 = vperm.xlu0 %1847, %v1550
    %v1849 = vpop.permute.xlu0 %1848
    %1852 = vset.pattern.permute.xlu0 0
    %1853 = vperm.xlu0 %1852, %v1551
    %v1854 = vpop.permute.xlu0 %1853
    %1857 = vset.pattern.permute.xlu0 0
    %1858 = vperm.xlu0 %1857, %v1552
    %v1859 = vpop.permute.xlu0 %1858
    %1862 = vset.pattern.permute.xlu0 0
    %1863 = vperm.xlu0 %1862, %v1553
    %v1864 = vpop.permute.xlu0 %1863
    %1867 = vset.pattern.permute.xlu0 0
    %1868 = vperm.xlu0 %1867, %v1554
    %v1869 = vpop.permute.xlu0 %1868
    %1872 = vset.pattern.permute.xlu0 0
    %1873 = vperm.xlu0 %1872, %v1555
    %v1874 = vpop.permute.xlu0 %1873
    %1877 = vset.pattern.permute.xlu0 0
    %1878 = vperm.xlu0 %1877, %v1556
    %v1879 = vpop.permute.xlu0 %1878
    %1882 = vset.pattern.permute.xlu0 0
    %1883 = vperm.xlu0 %1882, %v1557
    %v1884 = vpop.permute.xlu0 %1883
    %1887 = vset.pattern.permute.xlu0 0
    %1888 = vperm.xlu0 %1887, %v1558
    %v1889 = vpop.permute.xlu0 %1888
    %1892 = vset.pattern.permute.xlu0 0
    %1893 = vperm.xlu0 %1892, %v1559
    %v1894 = vpop.permute.xlu0 %1893
    %1897 = vset.pattern.permute.xlu0 0
    %1898 = vperm.xlu0 %1897, %v1560
    %v1899 = vpop.permute.xlu0 %1898
    %1902 = vset.pattern.permute.xlu0 0
    %1903 = vperm.xlu0 %1902, %v1561
    %v1904 = vpop.permute.xlu0 %1903
    %1907 = vset.pattern.permute.xlu0 0
    %1908 = vperm.xlu0 %1907, %v1562
    %v1909 = vpop.permute.xlu0 %1908
    %1912 = vset.pattern.permute.xlu0 0
    %1913 = vperm.xlu0 %1912, %v1563
    %v1914 = vpop.permute.xlu0 %1913
    %1917 = vset.pattern.permute.xlu0 0
    %1918 = vperm.xlu0 %1917, %v1564
    %v1919 = vpop.permute.xlu0 %1918
    %1922 = vset.pattern.permute.xlu0 0
    %1923 = vperm.xlu0 %1922, %v1565
    %v1924 = vpop.permute.xlu0 %1923
    %1927 = vset.pattern.permute.xlu0 0
    %1928 = vperm.xlu0 %1927, %v1566
    %v1929 = vpop.permute.xlu0 %1928
    %1932 = vset.pattern.permute.xlu0 0
    %1933 = vperm.xlu0 %1932, %v1567
    %v1934 = vpop.permute.xlu0 %1933
    %1937 = vset.pattern.permute.xlu0 0
    %1938 = vperm.xlu0 %1937, %v1568
    %v1939 = vpop.permute.xlu0 %1938
    %1942 = vset.pattern.permute.xlu0 0
    %1943 = vperm.xlu0 %1942, %v1569
    %v1944 = vpop.permute.xlu0 %1943
    %1947 = vset.pattern.permute.xlu0 0
    %1948 = vperm.xlu0 %1947, %v1570
    %v1949 = vpop.permute.xlu0 %1948
    %1952 = vset.pattern.permute.xlu0 0
    %1953 = vperm.xlu0 %1952, %v1571
    %v1954 = vpop.permute.xlu0 %1953
    %1957 = vset.pattern.permute.xlu0 0
    %1958 = vperm.xlu0 %1957, %v1572
    %v1959 = vpop.permute.xlu0 %1958
    %1962 = vset.pattern.permute.xlu0 0
    %1963 = vperm.xlu0 %1962, %v1573
    %v1964 = vpop.permute.xlu0 %1963
    %1967 = vset.pattern.permute.xlu0 0
    %1968 = vperm.xlu0 %1967, %v1574
    %v1969 = vpop.permute.xlu0 %1968
    %1972 = vset.pattern.permute.xlu0 0
    %1973 = vperm.xlu0 %1972, %v1575
    %v1974 = vpop.permute.xlu0 %1973
    %1977 = vset.pattern.permute.xlu0 0
    %1978 = vperm.xlu0 %1977, %v1576
    %v1979 = vpop.permute.xlu0 %1978
    %1982 = vset.pattern.permute.xlu0 0
    %1983 = vperm.xlu0 %1982, %v1577
    %v1984 = vpop.permute.xlu0 %1983
    %1987 = vset.pattern.permute.xlu0 0
    %1988 = vperm.xlu0 %1987, %v1578
    %v1989 = vpop.permute.xlu0 %1988
    %1992 = vset.pattern.permute.xlu0 0
    %1993 = vperm.xlu0 %1992, %v1579
    %v1994 = vpop.permute.xlu0 %1993
    %1997 = vset.pattern.permute.xlu0 0
    %1998 = vperm.xlu0 %1997, %v1580
    %v1999 = vpop.permute.xlu0 %1998
    %2002 = vset.pattern.permute.xlu0 0
    %2003 = vperm.xlu0 %2002, %v1581
    %v2004 = vpop.permute.xlu0 %2003
    %2007 = vset.pattern.permute.xlu0 0
    %2008 = vperm.xlu0 %2007, %v1582
    %v2009 = vpop.permute.xlu0 %2008
    %2012 = vset.pattern.permute.xlu0 0
    %2013 = vperm.xlu0 %2012, %v1583
    %v2014 = vpop.permute.xlu0 %2013
    %2017 = vset.pattern.permute.xlu0 0
    %2018 = vperm.xlu0 %2017, %v1584
    %v2019 = vpop.permute.xlu0 %2018
    %2022 = vset.pattern.permute.xlu0 0
    %2023 = vperm.xlu0 %2022, %v1585
    %v2024 = vpop.permute.xlu0 %2023
    %2027 = vset.pattern.permute.xlu0 0
    %2028 = vperm.xlu0 %2027, %v1586
    %v2029 = vpop.permute.xlu0 %2028
    %2032 = vset.pattern.permute.xlu0 0
    %2033 = vperm.xlu0 %2032, %v1587
    %v2034 = vpop.permute.xlu0 %2033
    %2037 = vset.pattern.permute.xlu0 0
    %2038 = vperm.xlu0 %2037, %v1588
    %v2039 = vpop.permute.xlu0 %2038
    %2042 = vset.pattern.permute.xlu0 0
    %2043 = vperm.xlu0 %2042, %v1589
    %v2044 = vpop.permute.xlu0 %2043
    %2047 = vset.pattern.permute.xlu0 0
    %2048 = vperm.xlu0 %2047, %v1590
    %v2049 = vpop.permute.xlu0 %2048
    %2052 = vset.pattern.permute.xlu0 0
    %2053 = vperm.xlu0 %2052, %v1591
    %v2054 = vpop.permute.xlu0 %2053
    %2057 = vset.pattern.permute.xlu0 0
    %2058 = vperm.xlu0 %2057, %v1592
    %v2059 = vpop.permute.xlu0 %2058
    %2062 = vset.pattern.permute.xlu0 0
    %2063 = vperm.xlu0 %2062, %v1593
    %v2064 = vpop.permute.xlu0 %2063
    %2067 = vset.pattern.permute.xlu0 0
    %2068 = vperm.xlu0 %2067, %v1594
    %v2069 = vpop.permute.xlu0 %2068
    %2072 = vset.pattern.permute.xlu0 0
    %2073 = vperm.xlu0 %2072, %v1595
    %v2074 = vpop.permute.xlu0 %2073
    %2077 = vset.pattern.permute.xlu0 0
    %2078 = vperm.xlu0 %2077, %v1596
    %v2079 = vpop.permute.xlu0 %2078
    %2082 = vset.pattern.permute.xlu0 0
    %2083 = vperm.xlu0 %2082, %v1597
    %v2084 = vpop.permute.xlu0 %2083
    %2087 = vset.pattern.permute.xlu0 0
    %2088 = vperm.xlu0 %2087, %v1598
    %v2089 = vpop.permute.xlu0 %2088
    %2092 = vset.pattern.permute.xlu0 0
    %2093 = vperm.xlu0 %2092, %v1599
    %v2094 = vpop.permute.xlu0 %2093
    %2097 = vset.pattern.permute.xlu0 0
    %2098 = vperm.xlu0 %2097, %v1600
    %v2099 = vpop.permute.xlu0 %2098
    %2102 = vset.pattern.permute.xlu0 0
    %2103 = vperm.xlu0 %2102, %v1601
    %v2104 = vpop.permute.xlu0 %2103
    %2107 = vset.pattern.permute.xlu0 0
    %2108 = vperm.xlu0 %2107, %v1602
    %v2109 = vpop.permute.xlu0 %2108
    %2112 = vset.pattern.permute.xlu0 0
    %2113 = vperm.xlu0 %2112, %v1603
    %v2114 = vpop.permute.xlu0 %2113
    %2117 = vset.pattern.permute.xlu0 0
    %2118 = vperm.xlu0 %2117, %v1604
    %v2119 = vpop.permute.xlu0 %2118
    %2122 = vset.pattern.permute.xlu0 0
    %2123 = vperm.xlu0 %2122, %v1605
    %v2124 = vpop.permute.xlu0 %2123
    %2127 = vset.pattern.permute.xlu0 0
    %2128 = vperm.xlu0 %2127, %v1606
    %v2129 = vpop.permute.xlu0 %2128
    %2132 = vset.pattern.permute.xlu0 0
    %2133 = vperm.xlu0 %2132, %v1607
    %v2134 = vpop.permute.xlu0 %2133
    %2137 = vset.pattern.permute.xlu0 0
    %2138 = vperm.xlu0 %2137, %v1608
    %v2139 = vpop.permute.xlu0 %2138
    %2142 = vset.pattern.permute.xlu0 0
    %2143 = vperm.xlu0 %2142, %v1609
    %v2144 = vpop.permute.xlu0 %2143
    %2147 = vset.pattern.permute.xlu0 0
    %2148 = vperm.xlu0 %2147, %v1610
    %v2149 = vpop.permute.xlu0 %2148
    %2152 = vset.pattern.permute.xlu0 0
    %2153 = vperm.xlu0 %2152, %v1611
    %v2154 = vpop.permute.xlu0 %2153
    %2157 = vset.pattern.permute.xlu0 0
    %2158 = vperm.xlu0 %2157, %v1612
    %v2159 = vpop.permute.xlu0 %2158
    %2162 = vset.pattern.permute.xlu0 0
    %2163 = vperm.xlu0 %2162, %v1613
    %v2164 = vpop.permute.xlu0 %2163
    %2167 = vset.pattern.permute.xlu0 0
    %2168 = vperm.xlu0 %2167, %v1614
    %v2169 = vpop.permute.xlu0 %2168
    %2172 = vset.pattern.permute.xlu0 0
    %2173 = vperm.xlu0 %2172, %v1615
    %v2174 = vpop.permute.xlu0 %2173
    %2177 = vset.pattern.permute.xlu0 0
    %2178 = vperm.xlu0 %2177, %v1616
    %v2179 = vpop.permute.xlu0 %2178
    %2182 = vset.pattern.permute.xlu0 0
    %2183 = vperm.xlu0 %2182, %v1617
    %v2184 = vpop.permute.xlu0 %2183
    %2187 = vset.pattern.permute.xlu0 0
    %2188 = vperm.xlu0 %2187, %v1618
    %v2189 = vpop.permute.xlu0 %2188
    %2192 = vset.pattern.permute.xlu0 0
    %2193 = vperm.xlu0 %2192, %v1619
    %v2194 = vpop.permute.xlu0 %2193
    %2197 = vset.pattern.permute.xlu0 0
    %2198 = vperm.xlu0 %2197, %v1620
    %v2199 = vpop.permute.xlu0 %2198
    %2202 = vset.pattern.permute.xlu0 0
    %2203 = vperm.xlu0 %2202, %v1621
    %v2204 = vpop.permute.xlu0 %2203
    %2207 = vset.pattern.permute.xlu0 0
    %2208 = vperm.xlu0 %2207, %v1622
    %v2209 = vpop.permute.xlu0 %2208
    %2212 = vset.pattern.permute.xlu0 0
    %2213 = vperm.xlu0 %2212, %v1623
    %v2214 = vpop.permute.xlu0 %2213
    %2217 = vset.pattern.permute.xlu0 0
    %2218 = vperm.xlu0 %2217, %v1624
    %v2219 = vpop.permute.xlu0 %2218
    %2222 = vset.pattern.permute.xlu0 0
    %2223 = vperm.xlu0 %2222, %v1625
    %v2224 = vpop.permute.xlu0 %2223
    %2227 = vset.pattern.permute.xlu0 0
    %2228 = vperm.xlu0 %2227, %v1626
    %v2229 = vpop.permute.xlu0 %2228
    %2232 = vset.pattern.permute.xlu0 0
    %2233 = vperm.xlu0 %2232, %v1627
    %v2234 = vpop.permute.xlu0 %2233
    %2237 = vset.pattern.permute.xlu0 0
    %2238 = vperm.xlu0 %2237, %v1628
    %v2239 = vpop.permute.xlu0 %2238
    %2242 = vset.pattern.permute.xlu0 0
    %2243 = vperm.xlu0 %2242, %v1629
    %v2244 = vpop.permute.xlu0 %2243
    %2247 = vset.pattern.permute.xlu0 0
    %2248 = vperm.xlu0 %2247, %v1630
    %v2249 = vpop.permute.xlu0 %2248
    %2252 = vset.pattern.permute.xlu0 0
    %2253 = vperm.xlu0 %2252, %v1631
    %v2254 = vpop.permute.xlu0 %2253
    %2257 = vset.pattern.permute.xlu0 0
    %2258 = vperm.xlu0 %2257, %v1632
    %v2259 = vpop.permute.xlu0 %2258
    %2262 = vset.pattern.permute.xlu0 0
    %2263 = vperm.xlu0 %2262, %v1633
    %v2264 = vpop.permute.xlu0 %2263
    %2267 = vset.pattern.permute.xlu0 0
    %2268 = vperm.xlu0 %2267, %v1634
    %v2269 = vpop.permute.xlu0 %2268
    %2272 = vset.pattern.permute.xlu0 0
    %2273 = vperm.xlu0 %2272, %v1635
    %v2274 = vpop.permute.xlu0 %2273
    %v2277 = vsel %vm205, %v1380, 0
    %v2280 = vsel %vm205, %v1381, 0
    %v2283 = vsel %vm205, %v1382, 0
    %v2286 = vsel %vm205, %v1383, 0
    %v2289 = vsel %vm205, %v1384, 0
    %v2292 = vsel %vm205, %v1385, 0
    %v2295 = vsel %vm205, %v1386, 0
    %v2298 = vsel %vm205, %v1387, 0
    %v2301 = vsel %vm205, %v1388, 0
    %v2304 = vsel %vm205, %v1389, 0
    %v2307 = vsel %vm205, %v1390, 0
    %v2310 = vsel %vm205, %v1391, 0
    %v2313 = vsel %vm205, %v1392, 0
    %v2316 = vsel %vm205, %v1393, 0
    %v2319 = vsel %vm205, %v1394, 0
    %v2322 = vsel %vm205, %v1395, 0
    %v2325 = vsel %vm205, %v1396, 0
    %v2328 = vsel %vm205, %v1397, 0
    %v2331 = vsel %vm205, %v1398, 0
    %v2334 = vsel %vm205, %v1399, 0
    %v2337 = vsel %vm205, %v1400, 0
    %v2340 = vsel %vm205, %v1401, 0
    %v2343 = vsel %vm205, %v1402, 0
    %v2346 = vsel %vm205, %v1403, 0
    %v2349 = vsel %vm205, %v1404, 0
    %v2352 = vsel %vm205, %v1405, 0
    %v2355 = vsel %vm205, %v1406, 0
    %v2358 = vsel %vm205, %v1407, 0
    %v2361 = vsel %vm205, %v1408, 0
    %v2364 = vsel %vm205, %v1409, 0
    %v2367 = vsel %vm205, %v1410, 0
    %v2370 = vsel %vm205, %v1411, 0
    %v2373 = vsel %vm205, %v1412, 0
    %v2376 = vsel %vm205, %v1413, 0
    %v2379 = vsel %vm205, %v1414, 0
    %v2382 = vsel %vm205, %v1415, 0
    %v2385 = vsel %vm205, %v1416, 0
    %v2388 = vsel %vm205, %v1417, 0
    %v2391 = vsel %vm205, %v1418, 0
    %v2394 = vsel %vm205, %v1419, 0
    %v2397 = vsel %vm205, %v1420, 0
    %v2400 = vsel %vm205, %v1421, 0
    %v2403 = vsel %vm205, %v1422, 0
    %v2406 = vsel %vm205, %v1423, 0
    %v2409 = vsel %vm205, %v1424, 0
    %v2412 = vsel %vm205, %v1425, 0
    %v2415 = vsel %vm205, %v1426, 0
    %v2418 = vsel %vm205, %v1427, 0
    %v2421 = vsel %vm205, %v1428, 0
    %v2424 = vsel %vm205, %v1429, 0
    %v2427 = vsel %vm205, %v1430, 0
    %v2430 = vsel %vm205, %v1431, 0
    %v2433 = vsel %vm205, %v1432, 0
    %v2436 = vsel %vm205, %v1433, 0
    %v2439 = vsel %vm205, %v1434, 0
    %v2442 = vsel %vm205, %v1435, 0
    %v2445 = vsel %vm205, %v1436, 0
    %v2448 = vsel %vm205, %v1437, 0
    %v2451 = vsel %vm205, %v1438, 0
    %v2454 = vsel %vm205, %v1439, 0
    %v2457 = vsel %vm205, %v1440, 0
    %v2460 = vsel %vm205, %v1441, 0
    %v2463 = vsel %vm205, %v1442, 0
    %v2466 = vsel %vm205, %v1443, 0
    %v2469 = vsel %vm205, %v1444, 0
    %v2472 = vsel %vm205, %v1445, 0
    %v2475 = vsel %vm205, %v1446, 0
    %v2478 = vsel %vm205, %v1447, 0
    %v2481 = vsel %vm205, %v1448, 0
    %v2484 = vsel %vm205, %v1449, 0
    %v2487 = vsel %vm205, %v1450, 0
    %v2490 = vsel %vm205, %v1451, 0
    %v2493 = vsel %vm205, %v1452, 0
    %v2496 = vsel %vm205, %v1453, 0
    %v2499 = vsel %vm205, %v1454, 0
    %v2502 = vsel %vm205, %v1455, 0
    %v2505 = vsel %vm205, %v1456, 0
    %v2508 = vsel %vm205, %v1457, 0
    %v2511 = vsel %vm205, %v1458, 0
    %v2514 = vsel %vm205, %v1459, 0
    %v2517 = vsel %vm205, %v1460, 0
    %v2520 = vsel %vm205, %v1461, 0
    %v2523 = vsel %vm205, %v1462, 0
    %v2526 = vsel %vm205, %v1463, 0
    %v2529 = vsel %vm205, %v1464, 0
    %v2532 = vsel %vm205, %v1465, 0
    %v2535 = vsel %vm205, %v1466, 0
    %v2538 = vsel %vm205, %v1467, 0
    %v2541 = vsel %vm205, %v1468, 0
    %v2544 = vsel %vm205, %v1469, 0
    %v2547 = vsel %vm205, %v1470, 0
    %v2550 = vsel %vm205, %v1471, 0
    %v2553 = vsel %vm205, %v1472, 0
    %v2556 = vsel %vm205, %v1473, 0
    %v2559 = vsel %vm205, %v1474, 0
    %v2562 = vsel %vm205, %v1475, 0
    %v2565 = vsel %vm205, %v1476, 0
    %v2568 = vsel %vm205, %v1477, 0
    %v2571 = vsel %vm205, %v1478, 0
    %v2574 = vsel %vm205, %v1479, 0
    %v2577 = vsel %vm205, %v1480, 0
    %v2580 = vsel %vm205, %v1481, 0
    %v2583 = vsel %vm205, %v1482, 0
    %v2586 = vsel %vm205, %v1483, 0
    %v2589 = vsel %vm205, %v1484, 0
    %v2592 = vsel %vm205, %v1485, 0
    %v2595 = vsel %vm205, %v1486, 0
    %v2598 = vsel %vm205, %v1487, 0
    %v2601 = vsel %vm205, %v1488, 0
    %v2604 = vsel %vm205, %v1489, 0
    %v2607 = vsel %vm205, %v1490, 0
    %v2610 = vsel %vm205, %v1491, 0
    %v2613 = vsel %vm205, %v1492, 0
    %v2616 = vsel %vm205, %v1493, 0
    %v2619 = vsel %vm205, %v1494, 0
    %v2622 = vsel %vm205, %v1495, 0
    %v2625 = vsel %vm205, %v1496, 0
    %v2628 = vsel %vm205, %v1497, 0
    %v2631 = vsel %vm205, %v1498, 0
    %v2634 = vsel %vm205, %v1499, 0
    %v2637 = vsel %vm205, %v1500, 0
    %v2640 = vsel %vm205, %v1501, 0
    %v2643 = vsel %vm205, %v1502, 0
    %v2646 = vsel %vm205, %v1503, 0
    %v2649 = vsel %vm205, %v1504, 0
    %v2652 = vsel %vm205, %v1505, 0
    %v2655 = vsel %vm205, %v1506, 0
    %v2658 = vsel %vm205, %v1507, 0
    %2660 = vmatpush.msra.mxu0 0.0
    %2661 = vmatpush.msra.mxu0 0.0
    %2662 = vmatpush.msra.mxu0 0.0
    %2663 = vmatpush.msra.mxu0 0.0
    %2664 = vmatpush.msra.mxu0 0.0
    %2665 = vmatpush.msra.mxu0 0.0
    %2666 = vmatpush.msra.mxu0 0.0
    %2667 = vmatpush.msra.mxu0 0.0
    %2668 = vmatpush.msra.mxu0 0.0
    %2669 = vmatpush.msra.mxu0 0.0
    %2670 = vmatpush.msra.mxu0 0.0
    %2671 = vmatpush.msra.mxu0 0.0
    %2672 = vmatpush.msra.mxu0 %v1379
    %2673 = vmatpush.msra.mxu0 %v1378
    %2674 = vmatpush.msra.mxu0 %v1377
    %2675 = vmatpush.msra.mxu0 %v1376
    %2676 = vmatmul.f32.gmra.mxu0 %v2277
    %v2677 = vpop.f32.mrf.mxu0
    %v2678 = vadd.f32 %v1639, %v2677
    %2679 = vmatmul.f32.gmra.mxu0 %v2280
    %v2680 = vpop.f32.mrf.mxu0
    %v2681 = vadd.f32 %v1644, %v2680
    %2682 = vmatmul.f32.gmra.mxu0 %v2283
    %v2683 = vpop.f32.mrf.mxu0
    %v2684 = vadd.f32 %v1649, %v2683
    %2685 = vmatmul.f32.gmra.mxu0 %v2286
    %v2686 = vpop.f32.mrf.mxu0
    %v2687 = vadd.f32 %v1654, %v2686
    %2688 = vmatmul.f32.gmra.mxu0 %v2289
    %v2689 = vpop.f32.mrf.mxu0
    %v2690 = vadd.f32 %v1659, %v2689
    %2691 = vmatmul.f32.gmra.mxu0 %v2292
    %v2692 = vpop.f32.mrf.mxu0
    %v2693 = vadd.f32 %v1664, %v2692
    %2694 = vmatmul.f32.gmra.mxu0 %v2295
    %v2695 = vpop.f32.mrf.mxu0
    %v2696 = vadd.f32 %v1669, %v2695
    %2697 = vmatmul.f32.gmra.mxu0 %v2298
    %v2698 = vpop.f32.mrf.mxu0
    %v2699 = vadd.f32 %v1674, %v2698
    %2700 = vmatmul.f32.gmra.mxu0 %v2301
    %v2701 = vpop.f32.mrf.mxu0
    %v2702 = vadd.f32 %v1679, %v2701
    %2703 = vmatmul.f32.gmra.mxu0 %v2304
    %v2704 = vpop.f32.mrf.mxu0
    %v2705 = vadd.f32 %v1684, %v2704
    %2706 = vmatmul.f32.gmra.mxu0 %v2307
    %v2707 = vpop.f32.mrf.mxu0
    %v2708 = vadd.f32 %v1689, %v2707
    %2709 = vmatmul.f32.gmra.mxu0 %v2310
    %v2710 = vpop.f32.mrf.mxu0
    %v2711 = vadd.f32 %v1694, %v2710
    %2712 = vmatmul.f32.gmra.mxu0 %v2313
    %v2713 = vpop.f32.mrf.mxu0
    %v2714 = vadd.f32 %v1699, %v2713
    %2715 = vmatmul.f32.gmra.mxu0 %v2316
    %v2716 = vpop.f32.mrf.mxu0
    %v2717 = vadd.f32 %v1704, %v2716
    %2718 = vmatmul.f32.gmra.mxu0 %v2319
    %v2719 = vpop.f32.mrf.mxu0
    %v2720 = vadd.f32 %v1709, %v2719
    %2721 = vmatmul.f32.gmra.mxu0 %v2322
    %v2722 = vpop.f32.mrf.mxu0
    %v2723 = vadd.f32 %v1714, %v2722
    %2724 = vmatmul.f32.gmra.mxu0 %v2325
    %v2725 = vpop.f32.mrf.mxu0
    %v2726 = vadd.f32 %v1719, %v2725
    %2727 = vmatmul.f32.gmra.mxu0 %v2328
    %v2728 = vpop.f32.mrf.mxu0
    %v2729 = vadd.f32 %v1724, %v2728
    %2730 = vmatmul.f32.gmra.mxu0 %v2331
    %v2731 = vpop.f32.mrf.mxu0
    %v2732 = vadd.f32 %v1729, %v2731
    %2733 = vmatmul.f32.gmra.mxu0 %v2334
    %v2734 = vpop.f32.mrf.mxu0
    %v2735 = vadd.f32 %v1734, %v2734
    %2736 = vmatmul.f32.gmra.mxu0 %v2337
    %v2737 = vpop.f32.mrf.mxu0
    %v2738 = vadd.f32 %v1739, %v2737
    %2739 = vmatmul.f32.gmra.mxu0 %v2340
    %v2740 = vpop.f32.mrf.mxu0
    %v2741 = vadd.f32 %v1744, %v2740
    %2742 = vmatmul.f32.gmra.mxu0 %v2343
    %v2743 = vpop.f32.mrf.mxu0
    %v2744 = vadd.f32 %v1749, %v2743
    %2745 = vmatmul.f32.gmra.mxu0 %v2346
    %v2746 = vpop.f32.mrf.mxu0
    %v2747 = vadd.f32 %v1754, %v2746
    %2748 = vmatmul.f32.gmra.mxu0 %v2349
    %v2749 = vpop.f32.mrf.mxu0
    %v2750 = vadd.f32 %v1759, %v2749
    %2751 = vmatmul.f32.gmra.mxu0 %v2352
    %v2752 = vpop.f32.mrf.mxu0
    %v2753 = vadd.f32 %v1764, %v2752
    %2754 = vmatmul.f32.gmra.mxu0 %v2355
    %v2755 = vpop.f32.mrf.mxu0
    %v2756 = vadd.f32 %v1769, %v2755
    %2757 = vmatmul.f32.gmra.mxu0 %v2358
    %v2758 = vpop.f32.mrf.mxu0
    %v2759 = vadd.f32 %v1774, %v2758
    %2760 = vmatmul.f32.gmra.mxu0 %v2361
    %v2761 = vpop.f32.mrf.mxu0
    %v2762 = vadd.f32 %v1779, %v2761
    %2763 = vmatmul.f32.gmra.mxu0 %v2364
    %v2764 = vpop.f32.mrf.mxu0
    %v2765 = vadd.f32 %v1784, %v2764
    %2766 = vmatmul.f32.gmra.mxu0 %v2367
    %v2767 = vpop.f32.mrf.mxu0
    %v2768 = vadd.f32 %v1789, %v2767
    %2769 = vmatmul.f32.gmra.mxu0 %v2370
    %v2770 = vpop.f32.mrf.mxu0
    %v2771 = vadd.f32 %v1794, %v2770
    %2772 = vmatmul.f32.gmra.mxu0 %v2373
    %v2773 = vpop.f32.mrf.mxu0
    %v2774 = vadd.f32 %v1799, %v2773
    %2775 = vmatmul.f32.gmra.mxu0 %v2376
    %v2776 = vpop.f32.mrf.mxu0
    %v2777 = vadd.f32 %v1804, %v2776
    %2778 = vmatmul.f32.gmra.mxu0 %v2379
    %v2779 = vpop.f32.mrf.mxu0
    %v2780 = vadd.f32 %v1809, %v2779
    %2781 = vmatmul.f32.gmra.mxu0 %v2382
    %v2782 = vpop.f32.mrf.mxu0
    %v2783 = vadd.f32 %v1814, %v2782
    %2784 = vmatmul.f32.gmra.mxu0 %v2385
    %v2785 = vpop.f32.mrf.mxu0
    %v2786 = vadd.f32 %v1819, %v2785
    %2787 = vmatmul.f32.gmra.mxu0 %v2388
    %v2788 = vpop.f32.mrf.mxu0
    %v2789 = vadd.f32 %v1824, %v2788
    %2790 = vmatmul.f32.gmra.mxu0 %v2391
    %v2791 = vpop.f32.mrf.mxu0
    %v2792 = vadd.f32 %v1829, %v2791
    %2793 = vmatmul.f32.gmra.mxu0 %v2394
    %v2794 = vpop.f32.mrf.mxu0
    %v2795 = vadd.f32 %v1834, %v2794
    %2796 = vmatmul.f32.gmra.mxu0 %v2397
    %v2797 = vpop.f32.mrf.mxu0
    %v2798 = vadd.f32 %v1839, %v2797
    %2799 = vmatmul.f32.gmra.mxu0 %v2400
    %v2800 = vpop.f32.mrf.mxu0
    %v2801 = vadd.f32 %v1844, %v2800
    %2802 = vmatmul.f32.gmra.mxu0 %v2403
    %v2803 = vpop.f32.mrf.mxu0
    %v2804 = vadd.f32 %v1849, %v2803
    %2805 = vmatmul.f32.gmra.mxu0 %v2406
    %v2806 = vpop.f32.mrf.mxu0
    %v2807 = vadd.f32 %v1854, %v2806
    %2808 = vmatmul.f32.gmra.mxu0 %v2409
    %v2809 = vpop.f32.mrf.mxu0
    %v2810 = vadd.f32 %v1859, %v2809
    %2811 = vmatmul.f32.gmra.mxu0 %v2412
    %v2812 = vpop.f32.mrf.mxu0
    %v2813 = vadd.f32 %v1864, %v2812
    %2814 = vmatmul.f32.gmra.mxu0 %v2415
    %v2815 = vpop.f32.mrf.mxu0
    %v2816 = vadd.f32 %v1869, %v2815
    %2817 = vmatmul.f32.gmra.mxu0 %v2418
    %v2818 = vpop.f32.mrf.mxu0
    %v2819 = vadd.f32 %v1874, %v2818
    %2820 = vmatmul.f32.gmra.mxu0 %v2421
    %v2821 = vpop.f32.mrf.mxu0
    %v2822 = vadd.f32 %v1879, %v2821
    %2823 = vmatmul.f32.gmra.mxu0 %v2424
    %v2824 = vpop.f32.mrf.mxu0
    %v2825 = vadd.f32 %v1884, %v2824
    %2826 = vmatmul.f32.gmra.mxu0 %v2427
    %v2827 = vpop.f32.mrf.mxu0
    %v2828 = vadd.f32 %v1889, %v2827
    %2829 = vmatmul.f32.gmra.mxu0 %v2430
    %v2830 = vpop.f32.mrf.mxu0
    %v2831 = vadd.f32 %v1894, %v2830
    %2832 = vmatmul.f32.gmra.mxu0 %v2433
    %v2833 = vpop.f32.mrf.mxu0
    %v2834 = vadd.f32 %v1899, %v2833
    %2835 = vmatmul.f32.gmra.mxu0 %v2436
    %v2836 = vpop.f32.mrf.mxu0
    %v2837 = vadd.f32 %v1904, %v2836
    %2838 = vmatmul.f32.gmra.mxu0 %v2439
    %v2839 = vpop.f32.mrf.mxu0
    %v2840 = vadd.f32 %v1909, %v2839
    %2841 = vmatmul.f32.gmra.mxu0 %v2442
    %v2842 = vpop.f32.mrf.mxu0
    %v2843 = vadd.f32 %v1914, %v2842
    %2844 = vmatmul.f32.gmra.mxu0 %v2445
    %v2845 = vpop.f32.mrf.mxu0
    %v2846 = vadd.f32 %v1919, %v2845
    %2847 = vmatmul.f32.gmra.mxu0 %v2448
    %v2848 = vpop.f32.mrf.mxu0
    %v2849 = vadd.f32 %v1924, %v2848
    %2850 = vmatmul.f32.gmra.mxu0 %v2451
    %v2851 = vpop.f32.mrf.mxu0
    %v2852 = vadd.f32 %v1929, %v2851
    %2853 = vmatmul.f32.gmra.mxu0 %v2454
    %v2854 = vpop.f32.mrf.mxu0
    %v2855 = vadd.f32 %v1934, %v2854
    %2856 = vmatmul.f32.gmra.mxu0 %v2457
    %v2857 = vpop.f32.mrf.mxu0
    %v2858 = vadd.f32 %v1939, %v2857
    %2859 = vmatmul.f32.gmra.mxu0 %v2460
    %v2860 = vpop.f32.mrf.mxu0
    %v2861 = vadd.f32 %v1944, %v2860
    %2862 = vmatmul.f32.gmra.mxu0 %v2463
    %v2863 = vpop.f32.mrf.mxu0
    %v2864 = vadd.f32 %v1949, %v2863
    %2865 = vmatmul.f32.gmra.mxu0 %v2466
    %v2866 = vpop.f32.mrf.mxu0
    %v2867 = vadd.f32 %v1954, %v2866
    %2868 = vmatmul.f32.gmra.mxu0 %v2469
    %v2869 = vpop.f32.mrf.mxu0
    %v2870 = vadd.f32 %v1959, %v2869
    %2871 = vmatmul.f32.gmra.mxu0 %v2472
    %v2872 = vpop.f32.mrf.mxu0
    %v2873 = vadd.f32 %v1964, %v2872
    %2874 = vmatmul.f32.gmra.mxu0 %v2475
    %v2875 = vpop.f32.mrf.mxu0
    %v2876 = vadd.f32 %v1969, %v2875
    %2877 = vmatmul.f32.gmra.mxu0 %v2478
    %v2878 = vpop.f32.mrf.mxu0
    %v2879 = vadd.f32 %v1974, %v2878
    %2880 = vmatmul.f32.gmra.mxu0 %v2481
    %v2881 = vpop.f32.mrf.mxu0
    %v2882 = vadd.f32 %v1979, %v2881
    %2883 = vmatmul.f32.gmra.mxu0 %v2484
    %v2884 = vpop.f32.mrf.mxu0
    %v2885 = vadd.f32 %v1984, %v2884
    %2886 = vmatmul.f32.gmra.mxu0 %v2487
    %v2887 = vpop.f32.mrf.mxu0
    %v2888 = vadd.f32 %v1989, %v2887
    %2889 = vmatmul.f32.gmra.mxu0 %v2490
    %v2890 = vpop.f32.mrf.mxu0
    %v2891 = vadd.f32 %v1994, %v2890
    %2892 = vmatmul.f32.gmra.mxu0 %v2493
    %v2893 = vpop.f32.mrf.mxu0
    %v2894 = vadd.f32 %v1999, %v2893
    %2895 = vmatmul.f32.gmra.mxu0 %v2496
    %v2896 = vpop.f32.mrf.mxu0
    %v2897 = vadd.f32 %v2004, %v2896
    %2898 = vmatmul.f32.gmra.mxu0 %v2499
    %v2899 = vpop.f32.mrf.mxu0
    %v2900 = vadd.f32 %v2009, %v2899
    %2901 = vmatmul.f32.gmra.mxu0 %v2502
    %v2902 = vpop.f32.mrf.mxu0
    %v2903 = vadd.f32 %v2014, %v2902
    %2904 = vmatmul.f32.gmra.mxu0 %v2505
    %v2905 = vpop.f32.mrf.mxu0
    %v2906 = vadd.f32 %v2019, %v2905
    %2907 = vmatmul.f32.gmra.mxu0 %v2508
    %v2908 = vpop.f32.mrf.mxu0
    %v2909 = vadd.f32 %v2024, %v2908
    %2910 = vmatmul.f32.gmra.mxu0 %v2511
    %v2911 = vpop.f32.mrf.mxu0
    %v2912 = vadd.f32 %v2029, %v2911
    %2913 = vmatmul.f32.gmra.mxu0 %v2514
    %v2914 = vpop.f32.mrf.mxu0
    %v2915 = vadd.f32 %v2034, %v2914
    %2916 = vmatmul.f32.gmra.mxu0 %v2517
    %v2917 = vpop.f32.mrf.mxu0
    %v2918 = vadd.f32 %v2039, %v2917
    %2919 = vmatmul.f32.gmra.mxu0 %v2520
    %v2920 = vpop.f32.mrf.mxu0
    %v2921 = vadd.f32 %v2044, %v2920
    %2922 = vmatmul.f32.gmra.mxu0 %v2523
    %v2923 = vpop.f32.mrf.mxu0
    %v2924 = vadd.f32 %v2049, %v2923
    %2925 = vmatmul.f32.gmra.mxu0 %v2526
    %v2926 = vpop.f32.mrf.mxu0
    %v2927 = vadd.f32 %v2054, %v2926
    %2928 = vmatmul.f32.gmra.mxu0 %v2529
    %v2929 = vpop.f32.mrf.mxu0
    %v2930 = vadd.f32 %v2059, %v2929
    %2931 = vmatmul.f32.gmra.mxu0 %v2532
    %v2932 = vpop.f32.mrf.mxu0
    %v2933 = vadd.f32 %v2064, %v2932
    %2934 = vmatmul.f32.gmra.mxu0 %v2535
    %v2935 = vpop.f32.mrf.mxu0
    %v2936 = vadd.f32 %v2069, %v2935
    %2937 = vmatmul.f32.gmra.mxu0 %v2538
    %v2938 = vpop.f32.mrf.mxu0
    %v2939 = vadd.f32 %v2074, %v2938
    %2940 = vmatmul.f32.gmra.mxu0 %v2541
    %v2941 = vpop.f32.mrf.mxu0
    %v2942 = vadd.f32 %v2079, %v2941
    %2943 = vmatmul.f32.gmra.mxu0 %v2544
    %v2944 = vpop.f32.mrf.mxu0
    %v2945 = vadd.f32 %v2084, %v2944
    %2946 = vmatmul.f32.gmra.mxu0 %v2547
    %v2947 = vpop.f32.mrf.mxu0
    %v2948 = vadd.f32 %v2089, %v2947
    %2949 = vmatmul.f32.gmra.mxu0 %v2550
    %v2950 = vpop.f32.mrf.mxu0
    %v2951 = vadd.f32 %v2094, %v2950
    %2952 = vmatmul.f32.gmra.mxu0 %v2553
    %v2953 = vpop.f32.mrf.mxu0
    %v2954 = vadd.f32 %v2099, %v2953
    %2955 = vmatmul.f32.gmra.mxu0 %v2556
    %v2956 = vpop.f32.mrf.mxu0
    %v2957 = vadd.f32 %v2104, %v2956
    %2958 = vmatmul.f32.gmra.mxu0 %v2559
    %v2959 = vpop.f32.mrf.mxu0
    %v2960 = vadd.f32 %v2109, %v2959
    %2961 = vmatmul.f32.gmra.mxu0 %v2562
    %v2962 = vpop.f32.mrf.mxu0
    %v2963 = vadd.f32 %v2114, %v2962
    %2964 = vmatmul.f32.gmra.mxu0 %v2565
    %v2965 = vpop.f32.mrf.mxu0
    %v2966 = vadd.f32 %v2119, %v2965
    %2967 = vmatmul.f32.gmra.mxu0 %v2568
    %v2968 = vpop.f32.mrf.mxu0
    %v2969 = vadd.f32 %v2124, %v2968
    %2970 = vmatmul.f32.gmra.mxu0 %v2571
    %v2971 = vpop.f32.mrf.mxu0
    %v2972 = vadd.f32 %v2129, %v2971
    %2973 = vmatmul.f32.gmra.mxu0 %v2574
    %v2974 = vpop.f32.mrf.mxu0
    %v2975 = vadd.f32 %v2134, %v2974
    %2976 = vmatmul.f32.gmra.mxu0 %v2577
    %v2977 = vpop.f32.mrf.mxu0
    %v2978 = vadd.f32 %v2139, %v2977
    %2979 = vmatmul.f32.gmra.mxu0 %v2580
    %v2980 = vpop.f32.mrf.mxu0
    %v2981 = vadd.f32 %v2144, %v2980
    %2982 = vmatmul.f32.gmra.mxu0 %v2583
    %v2983 = vpop.f32.mrf.mxu0
    %v2984 = vadd.f32 %v2149, %v2983
    %2985 = vmatmul.f32.gmra.mxu0 %v2586
    %v2986 = vpop.f32.mrf.mxu0
    %v2987 = vadd.f32 %v2154, %v2986
    %2988 = vmatmul.f32.gmra.mxu0 %v2589
    %v2989 = vpop.f32.mrf.mxu0
    %v2990 = vadd.f32 %v2159, %v2989
    %2991 = vmatmul.f32.gmra.mxu0 %v2592
    %v2992 = vpop.f32.mrf.mxu0
    %v2993 = vadd.f32 %v2164, %v2992
    %2994 = vmatmul.f32.gmra.mxu0 %v2595
    %v2995 = vpop.f32.mrf.mxu0
    %v2996 = vadd.f32 %v2169, %v2995
    %2997 = vmatmul.f32.gmra.mxu0 %v2598
    %v2998 = vpop.f32.mrf.mxu0
    %v2999 = vadd.f32 %v2174, %v2998
    %3000 = vmatmul.f32.gmra.mxu0 %v2601
    %v3001 = vpop.f32.mrf.mxu0
    %v3002 = vadd.f32 %v2179, %v3001
    %3003 = vmatmul.f32.gmra.mxu0 %v2604
    %v3004 = vpop.f32.mrf.mxu0
    %v3005 = vadd.f32 %v2184, %v3004
    %3006 = vmatmul.f32.gmra.mxu0 %v2607
    %v3007 = vpop.f32.mrf.mxu0
    %v3008 = vadd.f32 %v2189, %v3007
    %3009 = vmatmul.f32.gmra.mxu0 %v2610
    %v3010 = vpop.f32.mrf.mxu0
    %v3011 = vadd.f32 %v2194, %v3010
    %3012 = vmatmul.f32.gmra.mxu0 %v2613
    %v3013 = vpop.f32.mrf.mxu0
    %v3014 = vadd.f32 %v2199, %v3013
    %3015 = vmatmul.f32.gmra.mxu0 %v2616
    %v3016 = vpop.f32.mrf.mxu0
    %v3017 = vadd.f32 %v2204, %v3016
    %3018 = vmatmul.f32.gmra.mxu0 %v2619
    %v3019 = vpop.f32.mrf.mxu0
    %v3020 = vadd.f32 %v2209, %v3019
    %3021 = vmatmul.f32.gmra.mxu0 %v2622
    %v3022 = vpop.f32.mrf.mxu0
    %v3023 = vadd.f32 %v2214, %v3022
    %3024 = vmatmul.f32.gmra.mxu0 %v2625
    %v3025 = vpop.f32.mrf.mxu0
    %v3026 = vadd.f32 %v2219, %v3025
    %3027 = vmatmul.f32.gmra.mxu0 %v2628
    %v3028 = vpop.f32.mrf.mxu0
    %v3029 = vadd.f32 %v2224, %v3028
    %3030 = vmatmul.f32.gmra.mxu0 %v2631
    %v3031 = vpop.f32.mrf.mxu0
    %v3032 = vadd.f32 %v2229, %v3031
    %3033 = vmatmul.f32.gmra.mxu0 %v2634
    %v3034 = vpop.f32.mrf.mxu0
    %v3035 = vadd.f32 %v2234, %v3034
    %3036 = vmatmul.f32.gmra.mxu0 %v2637
    %v3037 = vpop.f32.mrf.mxu0
    %v3038 = vadd.f32 %v2239, %v3037
    %3039 = vmatmul.f32.gmra.mxu0 %v2640
    %v3040 = vpop.f32.mrf.mxu0
    %v3041 = vadd.f32 %v2244, %v3040
    %3042 = vmatmul.f32.gmra.mxu0 %v2643
    %v3043 = vpop.f32.mrf.mxu0
    %v3044 = vadd.f32 %v2249, %v3043
    %3045 = vmatmul.f32.gmra.mxu0 %v2646
    %v3046 = vpop.f32.mrf.mxu0
    %v3047 = vadd.f32 %v2254, %v3046
    %3048 = vmatmul.f32.gmra.mxu0 %v2649
    %v3049 = vpop.f32.mrf.mxu0
    %v3050 = vadd.f32 %v2259, %v3049
    %3051 = vmatmul.f32.gmra.mxu0 %v2652
    %v3052 = vpop.f32.mrf.mxu0
    %v3053 = vadd.f32 %v2264, %v3052
    %3054 = vmatmul.f32.gmra.mxu0 %v2655
    %v3055 = vpop.f32.mrf.mxu0
    %v3056 = vadd.f32 %v2269, %v3055
    %3057 = vmatmul.f32.gmra.mxu0 %v2658
    %v3058 = vpop.f32.mrf.mxu0
    %v3059 = vadd.f32 %v2274, %v3058
    %3060 = vdwg.mxu0
    %v3061 = vmul.f32 %v656, %v2678
    %v3062 = vmul.f32 %v659, %v2681
    %v3063 = vmul.f32 %v662, %v2684
    %v3064 = vmul.f32 %v665, %v2687
    %v3065 = vmul.f32 %v668, %v2690
    %v3066 = vmul.f32 %v671, %v2693
    %v3067 = vmul.f32 %v674, %v2696
    %v3068 = vmul.f32 %v677, %v2699
    %v3069 = vmul.f32 %v680, %v2702
    %v3070 = vmul.f32 %v683, %v2705
    %v3071 = vmul.f32 %v686, %v2708
    %v3072 = vmul.f32 %v689, %v2711
    %v3073 = vmul.f32 %v692, %v2714
    %v3074 = vmul.f32 %v695, %v2717
    %v3075 = vmul.f32 %v698, %v2720
    %v3076 = vmul.f32 %v701, %v2723
    %v3077 = vmul.f32 %v704, %v2726
    %v3078 = vmul.f32 %v707, %v2729
    %v3079 = vmul.f32 %v710, %v2732
    %v3080 = vmul.f32 %v713, %v2735
    %v3081 = vmul.f32 %v716, %v2738
    %v3082 = vmul.f32 %v719, %v2741
    %v3083 = vmul.f32 %v722, %v2744
    %v3084 = vmul.f32 %v725, %v2747
    %v3085 = vmul.f32 %v728, %v2750
    %v3086 = vmul.f32 %v731, %v2753
    %v3087 = vmul.f32 %v734, %v2756
    %v3088 = vmul.f32 %v737, %v2759
    %v3089 = vmul.f32 %v740, %v2762
    %v3090 = vmul.f32 %v743, %v2765
    %v3091 = vmul.f32 %v746, %v2768
    %v3092 = vmul.f32 %v749, %v2771
    %v3093 = vmul.f32 %v752, %v2774
    %v3094 = vmul.f32 %v755, %v2777
    %v3095 = vmul.f32 %v758, %v2780
    %v3096 = vmul.f32 %v761, %v2783
    %v3097 = vmul.f32 %v764, %v2786
    %v3098 = vmul.f32 %v767, %v2789
    %v3099 = vmul.f32 %v770, %v2792
    %v3100 = vmul.f32 %v773, %v2795
    %v3101 = vmul.f32 %v776, %v2798
    %v3102 = vmul.f32 %v779, %v2801
    %v3103 = vmul.f32 %v782, %v2804
    %v3104 = vmul.f32 %v785, %v2807
    %v3105 = vmul.f32 %v788, %v2810
    %v3106 = vmul.f32 %v791, %v2813
    %v3107 = vmul.f32 %v794, %v2816
    %v3108 = vmul.f32 %v797, %v2819
    %v3109 = vmul.f32 %v800, %v2822
    %v3110 = vmul.f32 %v803, %v2825
    %v3111 = vmul.f32 %v806, %v2828
    %v3112 = vmul.f32 %v809, %v2831
    %v3113 = vmul.f32 %v812, %v2834
    %v3114 = vmul.f32 %v815, %v2837
    %v3115 = vmul.f32 %v818, %v2840
    %v3116 = vmul.f32 %v821, %v2843
    %v3117 = vmul.f32 %v824, %v2846
    %v3118 = vmul.f32 %v827, %v2849
    %v3119 = vmul.f32 %v830, %v2852
    %v3120 = vmul.f32 %v833, %v2855
    %v3121 = vmul.f32 %v836, %v2858
    %v3122 = vmul.f32 %v839, %v2861
    %v3123 = vmul.f32 %v842, %v2864
    %v3124 = vmul.f32 %v845, %v2867
    %v3125 = vmul.f32 %v848, %v2870
    %v3126 = vmul.f32 %v851, %v2873
    %v3127 = vmul.f32 %v854, %v2876
    %v3128 = vmul.f32 %v857, %v2879
    %v3129 = vmul.f32 %v860, %v2882
    %v3130 = vmul.f32 %v863, %v2885
    %v3131 = vmul.f32 %v866, %v2888
    %v3132 = vmul.f32 %v869, %v2891
    %v3133 = vmul.f32 %v872, %v2894
    %v3134 = vmul.f32 %v875, %v2897
    %v3135 = vmul.f32 %v878, %v2900
    %v3136 = vmul.f32 %v881, %v2903
    %v3137 = vmul.f32 %v884, %v2906
    %v3138 = vmul.f32 %v887, %v2909
    %v3139 = vmul.f32 %v890, %v2912
    %v3140 = vmul.f32 %v893, %v2915
    %v3141 = vmul.f32 %v896, %v2918
    %v3142 = vmul.f32 %v899, %v2921
    %v3143 = vmul.f32 %v902, %v2924
    %v3144 = vmul.f32 %v905, %v2927
    %v3145 = vmul.f32 %v908, %v2930
    %v3146 = vmul.f32 %v911, %v2933
    %v3147 = vmul.f32 %v914, %v2936
    %v3148 = vmul.f32 %v917, %v2939
    %v3149 = vmul.f32 %v920, %v2942
    %v3150 = vmul.f32 %v923, %v2945
    %v3151 = vmul.f32 %v926, %v2948
    %v3152 = vmul.f32 %v929, %v2951
    %v3153 = vmul.f32 %v932, %v2954
    %v3154 = vmul.f32 %v935, %v2957
    %v3155 = vmul.f32 %v938, %v2960
    %v3156 = vmul.f32 %v941, %v2963
    %v3157 = vmul.f32 %v944, %v2966
    %v3158 = vmul.f32 %v947, %v2969
    %v3159 = vmul.f32 %v950, %v2972
    %v3160 = vmul.f32 %v953, %v2975
    %v3161 = vmul.f32 %v956, %v2978
    %v3162 = vmul.f32 %v959, %v2981
    %v3163 = vmul.f32 %v962, %v2984
    %v3164 = vmul.f32 %v965, %v2987
    %v3165 = vmul.f32 %v968, %v2990
    %v3166 = vmul.f32 %v971, %v2993
    %v3167 = vmul.f32 %v974, %v2996
    %v3168 = vmul.f32 %v977, %v2999
    %v3169 = vmul.f32 %v980, %v3002
    %v3170 = vmul.f32 %v983, %v3005
    %v3171 = vmul.f32 %v986, %v3008
    %v3172 = vmul.f32 %v989, %v3011
    %v3173 = vmul.f32 %v992, %v3014
    %v3174 = vmul.f32 %v995, %v3017
    %v3175 = vmul.f32 %v998, %v3020
    %v3176 = vmul.f32 %v1001, %v3023
    %v3177 = vmul.f32 %v1004, %v3026
    %v3178 = vmul.f32 %v1007, %v3029
    %v3179 = vmul.f32 %v1010, %v3032
    %v3180 = vmul.f32 %v1013, %v3035
    %v3181 = vmul.f32 %v1016, %v3038
    %v3182 = vmul.f32 %v1019, %v3041
    %v3183 = vmul.f32 %v1022, %v3044
    %v3184 = vmul.f32 %v1025, %v3047
    %v3185 = vmul.f32 %v1028, %v3050
    %v3186 = vmul.f32 %v1031, %v3053
    %v3187 = vmul.f32 %v1034, %v3056
    %v3188 = vmul.f32 %v1037, %v3059
    %v3189 = vadd.f32 %v3061, %v3062
    %v3190 = vadd.f32 %v3189, %v3063
    %v3191 = vadd.f32 %v3190, %v3064
    %v3192 = vadd.f32 %v3191, %v3065
    %v3193 = vadd.f32 %v3192, %v3066
    %v3194 = vadd.f32 %v3193, %v3067
    %v3195 = vadd.f32 %v3194, %v3068
    %v3196 = vadd.f32 %v3195, %v3069
    %v3197 = vadd.f32 %v3196, %v3070
    %v3198 = vadd.f32 %v3197, %v3071
    %v3199 = vadd.f32 %v3198, %v3072
    %v3200 = vadd.f32 %v3199, %v3073
    %v3201 = vadd.f32 %v3200, %v3074
    %v3202 = vadd.f32 %v3201, %v3075
    %v3203 = vadd.f32 %v3202, %v3076
    %v3204 = vadd.f32 %v3203, %v3077
    %v3205 = vadd.f32 %v3204, %v3078
    %v3206 = vadd.f32 %v3205, %v3079
    %v3207 = vadd.f32 %v3206, %v3080
    %v3208 = vadd.f32 %v3207, %v3081
    %v3209 = vadd.f32 %v3208, %v3082
    %v3210 = vadd.f32 %v3209, %v3083
    %v3211 = vadd.f32 %v3210, %v3084
    %v3212 = vadd.f32 %v3211, %v3085
    %v3213 = vadd.f32 %v3212, %v3086
    %v3214 = vadd.f32 %v3213, %v3087
    %v3215 = vadd.f32 %v3214, %v3088
    %v3216 = vadd.f32 %v3215, %v3089
    %v3217 = vadd.f32 %v3216, %v3090
    %v3218 = vadd.f32 %v3217, %v3091
    %v3219 = vadd.f32 %v3218, %v3092
    %v3220 = vadd.f32 %v3219, %v3093
    %v3221 = vadd.f32 %v3220, %v3094
    %v3222 = vadd.f32 %v3221, %v3095
    %v3223 = vadd.f32 %v3222, %v3096
    %v3224 = vadd.f32 %v3223, %v3097
    %v3225 = vadd.f32 %v3224, %v3098
    %v3226 = vadd.f32 %v3225, %v3099
    %v3227 = vadd.f32 %v3226, %v3100
    %v3228 = vadd.f32 %v3227, %v3101
    %v3229 = vadd.f32 %v3228, %v3102
    %v3230 = vadd.f32 %v3229, %v3103
    %v3231 = vadd.f32 %v3230, %v3104
    %v3232 = vadd.f32 %v3231, %v3105
    %v3233 = vadd.f32 %v3232, %v3106
    %v3234 = vadd.f32 %v3233, %v3107
    %v3235 = vadd.f32 %v3234, %v3108
    %v3236 = vadd.f32 %v3235, %v3109
    %v3237 = vadd.f32 %v3236, %v3110
    %v3238 = vadd.f32 %v3237, %v3111
    %v3239 = vadd.f32 %v3238, %v3112
    %v3240 = vadd.f32 %v3239, %v3113
    %v3241 = vadd.f32 %v3240, %v3114
    %v3242 = vadd.f32 %v3241, %v3115
    %v3243 = vadd.f32 %v3242, %v3116
    %v3244 = vadd.f32 %v3243, %v3117
    %v3245 = vadd.f32 %v3244, %v3118
    %v3246 = vadd.f32 %v3245, %v3119
    %v3247 = vadd.f32 %v3246, %v3120
    %v3248 = vadd.f32 %v3247, %v3121
    %v3249 = vadd.f32 %v3248, %v3122
    %v3250 = vadd.f32 %v3249, %v3123
    %v3251 = vadd.f32 %v3250, %v3124
    %v3252 = vadd.f32 %v3251, %v3125
    %v3253 = vadd.f32 %v3252, %v3126
    %v3254 = vadd.f32 %v3253, %v3127
    %v3255 = vadd.f32 %v3254, %v3128
    %v3256 = vadd.f32 %v3255, %v3129
    %v3257 = vadd.f32 %v3256, %v3130
    %v3258 = vadd.f32 %v3257, %v3131
    %v3259 = vadd.f32 %v3258, %v3132
    %v3260 = vadd.f32 %v3259, %v3133
    %v3261 = vadd.f32 %v3260, %v3134
    %v3262 = vadd.f32 %v3261, %v3135
    %v3263 = vadd.f32 %v3262, %v3136
    %v3264 = vadd.f32 %v3263, %v3137
    %v3265 = vadd.f32 %v3264, %v3138
    %v3266 = vadd.f32 %v3265, %v3139
    %v3267 = vadd.f32 %v3266, %v3140
    %v3268 = vadd.f32 %v3267, %v3141
    %v3269 = vadd.f32 %v3268, %v3142
    %v3270 = vadd.f32 %v3269, %v3143
    %v3271 = vadd.f32 %v3270, %v3144
    %v3272 = vadd.f32 %v3271, %v3145
    %v3273 = vadd.f32 %v3272, %v3146
    %v3274 = vadd.f32 %v3273, %v3147
    %v3275 = vadd.f32 %v3274, %v3148
    %v3276 = vadd.f32 %v3275, %v3149
    %v3277 = vadd.f32 %v3276, %v3150
    %v3278 = vadd.f32 %v3277, %v3151
    %v3279 = vadd.f32 %v3278, %v3152
    %v3280 = vadd.f32 %v3279, %v3153
    %v3281 = vadd.f32 %v3280, %v3154
    %v3282 = vadd.f32 %v3281, %v3155
    %v3283 = vadd.f32 %v3282, %v3156
    %v3284 = vadd.f32 %v3283, %v3157
    %v3285 = vadd.f32 %v3284, %v3158
    %v3286 = vadd.f32 %v3285, %v3159
    %v3287 = vadd.f32 %v3286, %v3160
    %v3288 = vadd.f32 %v3287, %v3161
    %v3289 = vadd.f32 %v3288, %v3162
    %v3290 = vadd.f32 %v3289, %v3163
    %v3291 = vadd.f32 %v3290, %v3164
    %v3292 = vadd.f32 %v3291, %v3165
    %v3293 = vadd.f32 %v3292, %v3166
    %v3294 = vadd.f32 %v3293, %v3167
    %v3295 = vadd.f32 %v3294, %v3168
    %v3296 = vadd.f32 %v3295, %v3169
    %v3297 = vadd.f32 %v3296, %v3170
    %v3298 = vadd.f32 %v3297, %v3171
    %v3299 = vadd.f32 %v3298, %v3172
    %v3300 = vadd.f32 %v3299, %v3173
    %v3301 = vadd.f32 %v3300, %v3174
    %v3302 = vadd.f32 %v3301, %v3175
    %v3303 = vadd.f32 %v3302, %v3176
    %v3304 = vadd.f32 %v3303, %v3177
    %v3305 = vadd.f32 %v3304, %v3178
    %v3306 = vadd.f32 %v3305, %v3179
    %v3307 = vadd.f32 %v3306, %v3180
    %v3308 = vadd.f32 %v3307, %v3181
    %v3309 = vadd.f32 %v3308, %v3182
    %v3310 = vadd.f32 %v3309, %v3183
    %v3311 = vadd.f32 %v3310, %v3184
    %v3312 = vadd.f32 %v3311, %v3185
    %v3313 = vadd.f32 %v3312, %v3186
    %v3314 = vadd.f32 %v3313, %v3187
    %v3315 = vadd.f32 %v3314, %v3188
    %v3316 = vrot.slane %v3315, 4
    %v3317 = vadd.f32 %v3315, %v3316
    %v3318 = vrot.slane %v3317, 2
    %v3319 = vadd.f32 %v3317, %v3318
    %v3320 = vrot.slane %v3319, 1
    %v3321 = vadd.f32 %v3319, %v3320
    %3322 = vst [vmem:[#allocation2] sm:$0x1] %v3321
    // Predicated region
    $region54: #{tpu_custom_call.1} parent=1 // pred_check
      _
    $region55: #{tpu_custom_call.1} parent=1 // pred_check_branch
      %3324 = sbr.rel (0) target = $region57
    $region56: #{tpu_custom_call.1} parent=1 // pred_region
      %3326 = vsyncadd [#allocation3], 0
      %s3328 = sshll.u32 [#allocation2], 4
      %s3329 = int_to_ptr.vmem [resolvable:$true] %s3328
      %s3330 = sshll.u32 %s13, 4
      %s3331 = int_to_ptr.hbm [resolvable:$true] %s3330
      %3333 = dma.vmem_to_hbm [thread:$0]  %s3329, 16, %s3331, [#allocation3]
    $region57: #{tpu_custom_call.1} parent=1 // pred_fallthru
      _
    // Predicated region
    $region58: #{tpu_custom_call.1} parent=1 // pred_check
      _
    $region59: #{tpu_custom_call.1} parent=1 // pred_check_branch
      %3335 = sbr.rel (0) target = $region61
    $region60: #{tpu_custom_call.1} parent=1 // pred_region
      %3337 = dma.done [#allocation3], 16
    $region61: #{tpu_custom_call.1} parent=1 // pred_fallthru
      _
    %3338 = vsyncpa [#allocation3], 1

</llo_original>
